<compile_context>
chip_gen: v7x
topology: tpu7x:2x2x1
jax: 0.10.0
libtpu: 0.0.40
codegen_flags: <defaults>
</compile_context>

<pallas_src>
import functools

import jax
import jax.numpy as jnp
from jax import lax
from jax.experimental import pallas as pl
from jax.experimental.pallas import tpu as pltpu


# ------------------------------ Pallas kernel --------------------------------
def _seq2spatial_kernel(x_ref, g_ref, b_ref, o_ref, *, hw, eps, keep_cls):
    # x_ref: (Bt, S, C) with S = 1 + hw
    # g_ref, b_ref: (1, C)
    # o_ref: (Bt, C_out, hw) with C_out = 2C (keep_cls) or C
    bt, s, c = x_ref.shape
    gamma = g_ref[...].astype(jnp.float32)                     # (1, C)
    beta = b_ref[...].astype(jnp.float32)                      # (1, C)
    inv_c = jnp.float32(1.0 / c)

    # Identity matrix used to transpose (S, C) -> (C, S) on the MXU.
    # Hoisted out of the per-row loop (only ~C*C/1024 vregs live).
    row = lax.broadcasted_iota(jnp.int32, (c, c), 0)
    col = lax.broadcasted_iota(jnp.int32, (c, c), 1)
    eye = (row == col).astype(jnp.float32)                     # (C, C)
    dims_t = (((1,), (1,)), ((), ()))                          # eye @ y.T

    def body(bi, carry):
        # --- one LayerNorm over the full slab (tokens + cls together) ---
        xb = x_ref[bi].astype(jnp.float32)                     # (S, C)
        mean = jnp.sum(xb, axis=-1, keepdims=True) * inv_c
        xc = xb - mean
        var = jnp.sum(xc * xc, axis=-1, keepdims=True) * inv_c
        y = xc * lax.rsqrt(var + jnp.float32(eps)) * gamma + beta   # (S, C)

        # --- one transpose of the whole slab: (S, C) -> (C, S) ---
        y_t = lax.dot_general(eye, y, dims_t,
                              preferred_element_type=jnp.float32,
                              precision=lax.Precision.HIGHEST)      # (C, S)

        tok = y_t[:, 1:]                                            # (C, hw)
        if keep_cls:
            cls_b = jnp.broadcast_to(y_t[:, 0:1], (c, hw))          # (C, hw)
            out_row = jnp.concatenate([tok, cls_b], axis=0)         # (2C, hw)
        else:
            out_row = tok
        o_ref[bi] = out_row.astype(o_ref.dtype)                     # one store/row
        return carry

    lax.fori_loop(0, bt, body, 0, unroll=2)


# ----------------------------- tiling selection --------------------------------
_TILE_VMEM_BUDGET = 12 * 1024 * 1024   # bytes for double-buffered in+out tiles
_VMEM_LIMIT_BYTES = 32 * 1024 * 1024   # fits physical VMEM on v5e/v6e/v7x


def _num_tensorcores():
    # v7x has 2 TensorCores per chip; v5e/v6e have 1.  Purely a perf hint.
    try:
        kind = jax.devices()[0].device_kind.lower()
    except Exception:
        return 1
    return 2 if "v7" in kind else 1


def _pick_block_b(batch, s, c, c_out, hw, num_cores):
    # VMEM per batch row for the double-buffered f32 input + output tiles.
    row_bytes = (s * c + c_out * hw) * 4
    cap = max(1, _TILE_VMEM_BUDGET // (2 * row_bytes))
    # One grid step per TensorCore: no wasted ~0.35us step overhead on
    # single-TC chips (v5e/v6e), even 2-way split on v7x.
    block_b = max(1, min((batch + num_cores - 1) // num_cores, cap))
    # Make block_b divide B exactly: no ragged padded last block and balanced
    # per-core work on v7x.
    while batch % block_b:
        block_b -= 1
    return block_b


# ------------------------------ pallas_call wrapper ----------------------------
def sequence2spatial_pallas(x, gamma, beta, *, hw, keep_cls, eps=1e-5):
    """x: (B, 1 + hw, C) -> (B, C_out, hw) via one fused Pallas kernel."""
    B, S, C = x.shape
    assert S == 1 + hw, "sequence length must be 1 + h*w"
    c_out = 2 * C if keep_cls else C
    block_b = _pick_block_b(B, S, C, c_out, hw, _num_tensorcores())
    num_steps = B // block_b

    kernel = functools.partial(_seq2spatial_kernel, hw=hw, eps=eps,
                               keep_cls=keep_cls)
    gamma2d = gamma.reshape(1, C)
    beta2d = beta.reshape(1, C)

    return pl.pallas_call(
        kernel,
        out_shape=jax.ShapeDtypeStruct((B, c_out, hw), x.dtype),
        grid_spec=pltpu.PrefetchScalarGridSpec(
            num_scalar_prefetch=0,
            grid=(num_steps,),
            in_specs=[
                pl.BlockSpec((block_b, S, C), lambda i: (i, 0, 0)),
                pl.BlockSpec((1, C), lambda i: (0, 0)),
                pl.BlockSpec((1, C), lambda i: (0, 0)),
            ],
            out_specs=pl.BlockSpec((block_b, c_out, hw), lambda i: (i, 0, 0)),
        ),
        compiler_params=pltpu.CompilerParams(
            dimension_semantics=("parallel",),
            vmem_limit_bytes=_VMEM_LIMIT_BYTES),
    )(x, gamma2d, beta2d)


# ---------------------------- Module forward ----------------------------------
def sequence2spatial_forward(x, gamma, beta, *, h, w, keep_cls, eps=1e-5):
    """x: (B, 1 + h*w, C) -> (B, C_out, h, w)  (C_out = 2C if keep_cls)."""
    B, S, C = x.shape
    out_flat = sequence2spatial_pallas(x, gamma, beta, hw=h * w,
                                       keep_cls=keep_cls, eps=eps)
    c_out = 2 * C if keep_cls else C
    # Channel-major reshape only: the NCHW transpose was fused into the kernel.
    return out_flat.reshape(B, c_out, h, w)


# --------------------------------- reference ----------------------------------
def _reference(x, gamma, beta, *, h, w, keep_cls, eps=1e-5):
    xf = x.astype(jnp.float32)
    mean = jnp.mean(xf, axis=-1, keepdims=True)
    var = jnp.mean((xf - mean) ** 2, axis=-1, keepdims=True)
    xn = (xf - mean) / jnp.sqrt(var + eps) * gamma + beta
    B, S, C = x.shape
    tokens = xn[:, 1:].reshape(B, h, w, C)
    if keep_cls:
        cls = jnp.broadcast_to(xn[:, 0][:, None, None, :], (B, h, w, C))
        tokens = jnp.concatenate([tokens, cls], axis=-1)
    return jnp.transpose(tokens, (0, 3, 1, 2))


# ----------------------------------- main --------------------------------------
if __name__ == "__main__":
    # Shapes consistent with the module's __init__:
    # patch = stride = 32 -> h = w = 1 + (224 - 32) // 32 = 7, seq = 1 + 49 = 50
    patch, stride = 32, 32
    h = 1 + (224 - patch) // stride
    w = 1 + (224 - patch) // stride
    B, C = 2, 64
    S = 1 + h * w

    key = jax.random.PRNGKey(0)
    kx, kg, kb = jax.random.split(key, 3)
    x = jax.random.normal(kx, (B, S, C), dtype=jnp.float32)
    # Deterministic synthetic LayerNorm params (not a checkpoint load).
    gamma = 1.0 + 0.1 * jax.random.normal(kg, (C,), dtype=jnp.float32)
    beta = 0.1 * jax.random.normal(kb, (C,), dtype=jnp.float32)

    for keep_cls in (True, False):
        out = sequence2spatial_forward(x, gamma, beta, h=h, w=w,
                                       keep_cls=keep_cls)
        out = jax.block_until_ready(out)
        ref = _reference(x, gamma, beta, h=h, w=w, keep_cls=keep_cls)
        c_out = 2 * C if keep_cls else C
        assert out.shape == (B, c_out, h, w), out.shape
        err = float(jnp.max(jnp.abs(out - ref)))
        assert err < 1e-4, err

    print("KERNEL_OK")
</pallas_src>

<mosaic_0001>
module attributes {stable_mosaic.version = 11 : i64} {
  func.func @_seq2spatial_kernel(%arg0: i32, %arg1: memref<2x50x64xf32, #tpu.memory_space<vmem>>, %arg2: memref<1x64xf32, #tpu.memory_space<vmem>>, %arg3: memref<1x64xf32, #tpu.memory_space<vmem>>, %arg4: memref<2x128x49xf32, #tpu.memory_space<vmem>>) attributes {dimension_semantics = [#tpu.dimension_semantics<parallel>], iteration_bounds = array<i64: 1>, scalar_prefetch = 0 : i64, scratch_operands = 0 : i64, tpu.core_type = #tpu.core_type<tc>, window_params = [{transform_indices = @transform_0, window_bounds = array<i64: 2, 50, 64>}, {pipeline_mode = #tpu.pipeline_mode<synchronous>, transform_indices = @transform_1, window_bounds = array<i64: 1, 64>}, {pipeline_mode = #tpu.pipeline_mode<synchronous>, transform_indices = @transform_2, window_bounds = array<i64: 1, 64>}, {transform_indices = @transform_3, window_bounds = array<i64: 2, 128, 49>}]} {
    %c0 = arith.constant 0 : index
    %c0_0 = arith.constant 0 : index
    %0 = vector.load %arg2[%c0, %c0_0] : memref<1x64xf32, #tpu.memory_space<vmem>>, vector<1x64xf32>
    %c0_1 = arith.constant 0 : index
    %c0_2 = arith.constant 0 : index
    %1 = vector.load %arg3[%c0_1, %c0_2] : memref<1x64xf32, #tpu.memory_space<vmem>>, vector<1x64xf32>
    %2 = tpu.iota {dimensions = array<i32: 0>} : vector<64x64xi32>
    %3 = tpu.iota {dimensions = array<i32: 1>} : vector<64x64xi32>
    %4 = arith.cmpi eq, %2, %3 : vector<64x64xi32>
    %5 = arith.extui %4 : vector<64x64xi1> to vector<64x64xi32>
    %6 = arith.sitofp %5 : vector<64x64xi32> to vector<64x64xf32>
    %cst = arith.constant 1.562500e-02 : f32
    %c0_i32 = arith.constant 0 : i32
    %7 = arith.index_cast %c0_i32 : i32 to index
    %c0_3 = arith.constant 0 : index
    %c0_4 = arith.constant 0 : index
    %8 = vector.load %arg1[%7, %c0_3, %c0_4] : memref<2x50x64xf32, #tpu.memory_space<vmem>>, vector<1x50x64xf32>
    %9 = vector.shape_cast %8 : vector<1x50x64xf32> to vector<50x64xf32>
    %cst_5 = arith.constant dense<0.000000e+00> : vector<50xf32>
    %10 = vector.multi_reduction <add>, %9, %cst_5 [1] : vector<50x64xf32> to vector<50xf32>
    %11 = vector.shape_cast %10 : vector<50xf32> to vector<50x1xf32>
    %12 = vector.broadcast %cst : f32 to vector<50x1xf32>
    %13 = arith.mulf %11, %12 : vector<50x1xf32>
    %14 = vector.broadcast %13 : vector<50x1xf32> to vector<50x64xf32>
    %15 = arith.subf %9, %14 : vector<50x64xf32>
    %16 = arith.mulf %15, %15 : vector<50x64xf32>
    %cst_6 = arith.constant dense<0.000000e+00> : vector<50xf32>
    %17 = vector.multi_reduction <add>, %16, %cst_6 [1] : vector<50x64xf32> to vector<50xf32>
    %18 = vector.shape_cast %17 : vector<50xf32> to vector<50x1xf32>
    %19 = vector.broadcast %cst : f32 to vector<50x1xf32>
    %20 = arith.mulf %18, %19 : vector<50x1xf32>
    %cst_7 = arith.constant 9.99999974E-6 : f32
    %21 = vector.broadcast %cst_7 : f32 to vector<50x1xf32>
    %22 = arith.addf %20, %21 : vector<50x1xf32>
    %23 = math.rsqrt %22 : vector<50x1xf32>
    %24 = vector.broadcast %23 : vector<50x1xf32> to vector<50x64xf32>
    %25 = arith.mulf %15, %24 : vector<50x64xf32>
    %26 = vector.broadcast %0 : vector<1x64xf32> to vector<50x64xf32>
    %27 = arith.mulf %25, %26 : vector<50x64xf32>
    %28 = vector.broadcast %1 : vector<1x64xf32> to vector<50x64xf32>
    %29 = arith.addf %27, %28 : vector<50x64xf32>
    %cst_8 = arith.constant dense<0.000000e+00> : vector<64x50xf32>
    %30 = tpu.matmul %6, %29, %cst_8 {dimension_numbers = #tpu.dot_dimension_numbers<[1], [1], [0], [0], [0, 0, 1, 0], [], []>, precision = #tpu.contract_precision<fp32>} : vector<64x64xf32>, vector<50x64xf32>, vector<64x50xf32> -> vector<64x50xf32>
    %31 = vector.extract_strided_slice %30 {offsets = [0, 1], sizes = [64, 49], strides = [1, 1]} : vector<64x50xf32> to vector<64x49xf32>
    %32 = vector.extract_strided_slice %30 {offsets = [0, 0], sizes = [64, 1], strides = [1, 1]} : vector<64x50xf32> to vector<64x1xf32>
    %33 = vector.shape_cast %32 : vector<64x1xf32> to vector<64x1xf32>
    %34 = vector.broadcast %33 : vector<64x1xf32> to vector<64x49xf32>
    %35 = tpu.concatenate %31, %34 in 0 : vector<64x49xf32>, vector<64x49xf32> -> vector<128x49xf32>
    %36 = arith.index_cast %c0_i32 : i32 to index
    %c0_9 = arith.constant 0 : index
    %c0_10 = arith.constant 0 : index
    %37 = vector.load %arg4[%36, %c0_9, %c0_10] : memref<2x128x49xf32, #tpu.memory_space<vmem>>, vector<1x128x49xf32>
    %38 = vector.shape_cast %37 : vector<1x128x49xf32> to vector<128x49xf32>
    %39 = vector.shape_cast %35 : vector<128x49xf32> to vector<1x128x49xf32>
    tpu.vector_store %arg4[%36, %c0_9, %c0_10], %39 {strides = array<i32>} : memref<2x128x49xf32, #tpu.memory_space<vmem>>, vector<1x128x49xf32>,
    %c1_i32 = arith.constant 1 : i32
    %40 = arith.index_cast %c1_i32 : i32 to index
    %c0_11 = arith.constant 0 : index
    %c0_12 = arith.constant 0 : index
    %41 = vector.load %arg1[%40, %c0_11, %c0_12] : memref<2x50x64xf32, #tpu.memory_space<vmem>>, vector<1x50x64xf32>
    %42 = vector.shape_cast %41 : vector<1x50x64xf32> to vector<50x64xf32>
    %cst_13 = arith.constant dense<0.000000e+00> : vector<50xf32>
    %43 = vector.multi_reduction <add>, %42, %cst_13 [1] : vector<50x64xf32> to vector<50xf32>
    %44 = vector.shape_cast %43 : vector<50xf32> to vector<50x1xf32>
    %45 = vector.broadcast %cst : f32 to vector<50x1xf32>
    %46 = arith.mulf %44, %45 : vector<50x1xf32>
    %47 = vector.broadcast %46 : vector<50x1xf32> to vector<50x64xf32>
    %48 = arith.subf %42, %47 : vector<50x64xf32>
    %49 = arith.mulf %48, %48 : vector<50x64xf32>
    %cst_14 = arith.constant dense<0.000000e+00> : vector<50xf32>
    %50 = vector.multi_reduction <add>, %49, %cst_14 [1] : vector<50x64xf32> to vector<50xf32>
    %51 = vector.shape_cast %50 : vector<50xf32> to vector<50x1xf32>
    %52 = vector.broadcast %cst : f32 to vector<50x1xf32>
    %53 = arith.mulf %51, %52 : vector<50x1xf32>
    %cst_15 = arith.constant 9.99999974E-6 : f32
    %54 = vector.broadcast %cst_15 : f32 to vector<50x1xf32>
    %55 = arith.addf %53, %54 : vector<50x1xf32>
    %56 = math.rsqrt %55 : vector<50x1xf32>
    %57 = vector.broadcast %56 : vector<50x1xf32> to vector<50x64xf32>
    %58 = arith.mulf %48, %57 : vector<50x64xf32>
    %59 = vector.broadcast %0 : vector<1x64xf32> to vector<50x64xf32>
    %60 = arith.mulf %58, %59 : vector<50x64xf32>
    %61 = vector.broadcast %1 : vector<1x64xf32> to vector<50x64xf32>
    %62 = arith.addf %60, %61 : vector<50x64xf32>
    %cst_16 = arith.constant dense<0.000000e+00> : vector<64x50xf32>
    %63 = tpu.matmul %6, %62, %cst_16 {dimension_numbers = #tpu.dot_dimension_numbers<[1], [1], [0], [0], [0, 0, 1, 0], [], []>, precision = #tpu.contract_precision<fp32>} : vector<64x64xf32>, vector<50x64xf32>, vector<64x50xf32> -> vector<64x50xf32>
    %64 = vector.extract_strided_slice %63 {offsets = [0, 1], sizes = [64, 49], strides = [1, 1]} : vector<64x50xf32> to vector<64x49xf32>
    %65 = vector.extract_strided_slice %63 {offsets = [0, 0], sizes = [64, 1], strides = [1, 1]} : vector<64x50xf32> to vector<64x1xf32>
    %66 = vector.shape_cast %65 : vector<64x1xf32> to vector<64x1xf32>
    %67 = vector.broadcast %66 : vector<64x1xf32> to vector<64x49xf32>
    %68 = tpu.concatenate %64, %67 in 0 : vector<64x49xf32>, vector<64x49xf32> -> vector<128x49xf32>
    %69 = arith.index_cast %c1_i32 : i32 to index
    %c0_17 = arith.constant 0 : index
    %c0_18 = arith.constant 0 : index
    %70 = vector.load %arg4[%69, %c0_17, %c0_18] : memref<2x128x49xf32, #tpu.memory_space<vmem>>, vector<1x128x49xf32>
    %71 = vector.shape_cast %70 : vector<1x128x49xf32> to vector<128x49xf32>
    %72 = vector.shape_cast %68 : vector<128x49xf32> to vector<1x128x49xf32>
    tpu.vector_store %arg4[%69, %c0_17, %c0_18], %72 {strides = array<i32>} : memref<2x128x49xf32, #tpu.memory_space<vmem>>, vector<1x128x49xf32>,
    %c2_i32 = arith.constant 2 : i32
    return
  }
  func.func @transform_0(%arg0: i32) -> (i32, i32, i32) {
    %c0_i32 = arith.constant 0 : i32
    %c0_i32_0 = arith.constant 0 : i32
    %c0_i32_1 = arith.constant 0 : i32
    return %arg0, %c0_i32, %c0_i32_0 : i32, i32, i32
  }
  func.func @transform_1(%arg0: i32) -> (i32, i32) {
    %c0_i32 = arith.constant 0 : i32
    %c0_i32_0 = arith.constant 0 : i32
    %c0_i32_1 = arith.constant 0 : i32
    return %c0_i32, %c0_i32_0 : i32, i32
  }
  func.func @transform_2(%arg0: i32) -> (i32, i32) {
    %c0_i32 = arith.constant 0 : i32
    %c0_i32_0 = arith.constant 0 : i32
    %c0_i32_1 = arith.constant 0 : i32
    return %c0_i32, %c0_i32_0 : i32, i32
  }
  func.func @transform_3(%arg0: i32) -> (i32, i32, i32) {
    %c0_i32 = arith.constant 0 : i32
    %c0_i32_0 = arith.constant 0 : i32
    %c0_i32_1 = arith.constant 0 : i32
    return %arg0, %c0_i32, %c0_i32_0 : i32, i32, i32
  }
}

</mosaic_0001>

<llo_original>
// kernel: tpu_custom_call.1
$region0: #{tpu_custom_call.1}
  #allocation0 [shape = 'u32[]', space=smem, size = 0x4, offset = 0x4, fixed_abs, tag = 'smem constant byte address 0x4 - core index']
  #allocation1 [shape = 'u32[144,128]{1,0:T(1,128)}', space=vmem, size = 0x12000, scoped, tag = 'internal scratch']
  %s0 = inlined_call_operand.vmem [shape: f32[2,50,64], index: 0, kind: input, shape index: {}]
  %s1 = inlined_call_operand.vmem [shape: f32[1,64], index: 1, kind: input, shape index: {}]
  %s2 = inlined_call_operand.vmem [shape: f32[1,64], index: 2, kind: input, shape index: {}]
  %s3 = inlined_call_operand.vmem [shape: f32[2,128,49], index: 3, kind: output, shape index: {}]
  %s4 = sld [smem:[#allocation0]]
  $region22: #{tpu_custom_call.1} parent=0
    _
  %s6 = ssub.s32 1, %s4
  %s7 = scalar_select 0, %s6, %s4
  // Predicated region
  $region2: #{tpu_custom_call.1} parent=0 // pred_check
    _
  $region3: #{tpu_custom_call.1} parent=0 // pred_check_branch
    %9 = sbr.rel (0) target = $region5
  $region4: #{tpu_custom_call.1} parent=0 // pred_region
    _
  $region5: #{tpu_custom_call.1} parent=0 // pred_fallthru
    _
  // Predicated region
  $region6: #{tpu_custom_call.1} parent=0 // pred_check
    _
  $region7: #{tpu_custom_call.1} parent=0 // pred_check_branch
    %11 = sbr.rel (0) target = $region9
  $region8: #{tpu_custom_call.1} parent=0 // pred_region
    _
  $region9: #{tpu_custom_call.1} parent=0 // pred_fallthru
    _
  // Predicated region
  $region10: #{tpu_custom_call.1} parent=0 // pred_check
    _
  $region11: #{tpu_custom_call.1} parent=0 // pred_check_branch
    %13 = sbr.rel (0) target = $region13
  $region12: #{tpu_custom_call.1} parent=0 // pred_region
    _
  $region13: #{tpu_custom_call.1} parent=0 // pred_fallthru
    _
  %v14 = vld [vmem:[%s1] sm:$0x1]
  %v15 = vld [vmem:[%s2] sm:$0x1]
  %v16 = vlaneseq
  %v17 = vshrl.u32 %v16, 7
  %v18 = vadd.s32 %v17, 8
  %v19 = vadd.s32 %v17, 16
  %v20 = vadd.s32 %v17, 24
  %v21 = vadd.s32 %v17, 32
  %v22 = vadd.s32 %v17, 40
  %v23 = vadd.s32 %v17, 48
  %v24 = vadd.s32 %v17, 56
  %v25 = vlaneseq
  %v26 = vand.u32 %v25, 127
  %vm27 = vcmp.eq.s32.totalorder %v17, %v26
  %vm28 = vcmp.eq.s32.totalorder %v18, %v26
  %vm29 = vcmp.eq.s32.totalorder %v19, %v26
  %vm30 = vcmp.eq.s32.totalorder %v20, %v26
  %vm31 = vcmp.eq.s32.totalorder %v21, %v26
  %vm32 = vcmp.eq.s32.totalorder %v22, %v26
  %vm33 = vcmp.eq.s32.totalorder %v23, %v26
  %vm34 = vcmp.eq.s32.totalorder %v24, %v26
  %v35 = vsel %vm27, 1, 0
  %v36 = vsel %vm28, 1, 0
  %v37 = vsel %vm29, 1, 0
  %v38 = vsel %vm30, 1, 0
  %v39 = vsel %vm31, 1, 0
  %v40 = vsel %vm32, 1, 0
  %v41 = vsel %vm33, 1, 0
  %v42 = vsel %vm34, 1, 0
  %v43 = vcvt.s32.f32 %v35
  %v44 = vcvt.s32.f32 %v36
  %v45 = vcvt.s32.f32 %v37
  %v46 = vcvt.s32.f32 %v38
  %v47 = vcvt.s32.f32 %v39
  %v48 = vcvt.s32.f32 %v40
  %v49 = vcvt.s32.f32 %v41
  %v50 = vcvt.s32.f32 %v42
  %v51 = vld [vmem:[%s0] sm:$0xff]
  %v52 = vld [vmem:[%s0 + $0x8] sm:$0xff]
  %v53 = vld [vmem:[%s0 + $0x10] sm:$0xff]
  %v54 = vld [vmem:[%s0 + $0x18] sm:$0xff]
  %v55 = vld [vmem:[%s0 + $0x20] sm:$0xff]
  %v56 = vld [vmem:[%s0 + $0x28] sm:$0xff]
  %v57 = vld [vmem:[%s0 + $0x30] sm:$0x3]
  %vm58 = vcmask 523264
  %v59 = vsel %vm58, %v51, 0.0
  %60 = vadd.xlane.f32.xlu0 %v59
  %v61 = vpop.xlane.xlu0 %60
  %v62 = vsel %vm58, %v52, 0.0
  %63 = vadd.xlane.f32.xlu0 %v62
  %v64 = vpop.xlane.xlu0 %63
  %v65 = vsel %vm58, %v53, 0.0
  %66 = vadd.xlane.f32.xlu0 %v65
  %v67 = vpop.xlane.xlu0 %66
  %v68 = vsel %vm58, %v54, 0.0
  %69 = vadd.xlane.f32.xlu0 %v68
  %v70 = vpop.xlane.xlu0 %69
  %v71 = vsel %vm58, %v55, 0.0
  %72 = vadd.xlane.f32.xlu0 %v71
  %v73 = vpop.xlane.xlu0 %72
  %v74 = vsel %vm58, %v56, 0.0
  %75 = vadd.xlane.f32.xlu0 %v74
  %v76 = vpop.xlane.xlu0 %75
  %vm77 = vcmask 517120
  %v78 = vsel %vm77, %v57, 0.0
  %79 = vadd.xlane.f32.xlu0 %v78
  %v80 = vpop.xlane.xlu0 %79
  %v81 = vmul.f32 %v61, 0.015625
  %v82 = vmul.f32 %v64, 0.015625
  %v83 = vmul.f32 %v67, 0.015625
  %v84 = vmul.f32 %v70, 0.015625
  %v85 = vmul.f32 %v73, 0.015625
  %v86 = vmul.f32 %v76, 0.015625
  %v87 = vmul.f32 %v80, 0.015625
  %v88 = vsub.f32 %v51, %v81
  %v89 = vsub.f32 %v52, %v82
  %v90 = vsub.f32 %v53, %v83
  %v91 = vsub.f32 %v54, %v84
  %v92 = vsub.f32 %v55, %v85
  %v93 = vsub.f32 %v56, %v86
  %v94 = vsub.f32 %v57, %v87
  %v95 = vmul.f32 %v88, %v88
  %v96 = vmul.f32 %v89, %v89
  %v97 = vmul.f32 %v90, %v90
  %v98 = vmul.f32 %v91, %v91
  %v99 = vmul.f32 %v92, %v92
  %v100 = vmul.f32 %v93, %v93
  %v101 = vmul.f32 %v94, %v94
  %v102 = vsel %vm58, %v95, 0.0
  %103 = vadd.xlane.f32.xlu0 %v102
  %v104 = vpop.xlane.xlu0 %103
  %v105 = vsel %vm58, %v96, 0.0
  %106 = vadd.xlane.f32.xlu0 %v105
  %v107 = vpop.xlane.xlu0 %106
  %v108 = vsel %vm58, %v97, 0.0
  %109 = vadd.xlane.f32.xlu0 %v108
  %v110 = vpop.xlane.xlu0 %109
  %v111 = vsel %vm58, %v98, 0.0
  %112 = vadd.xlane.f32.xlu0 %v111
  %v113 = vpop.xlane.xlu0 %112
  %v114 = vsel %vm58, %v99, 0.0
  %115 = vadd.xlane.f32.xlu0 %v114
  %v116 = vpop.xlane.xlu0 %115
  %v117 = vsel %vm58, %v100, 0.0
  %118 = vadd.xlane.f32.xlu0 %v117
  %v119 = vpop.xlane.xlu0 %118
  %v120 = vsel %vm77, %v101, 0.0
  %121 = vadd.xlane.f32.xlu0 %v120
  %v122 = vpop.xlane.xlu0 %121
  %v123 = vmul.f32 %v104, 0.015625
  %v124 = vmul.f32 %v107, 0.015625
  %v125 = vmul.f32 %v110, 0.015625
  %v126 = vmul.f32 %v113, 0.015625
  %v127 = vmul.f32 %v116, 0.015625
  %v128 = vmul.f32 %v119, 0.015625
  %v129 = vmul.f32 %v122, 0.015625
  %v130 = vadd.f32 %v123, 1e-05
  %v131 = vadd.f32 %v124, 1e-05
  %v132 = vadd.f32 %v125, 1e-05
  %v133 = vadd.f32 %v126, 1e-05
  %v134 = vadd.f32 %v127, 1e-05
  %v135 = vadd.f32 %v128, 1e-05
  %v136 = vadd.f32 %v129, 1e-05
  %v137 = vrsqrt.pop %v130
  %v138 = vrsqrt.pop %v131
  %v139 = vrsqrt.pop %v132
  %v140 = vrsqrt.pop %v133
  %v141 = vrsqrt.pop %v134
  %v142 = vrsqrt.pop %v135
  %v143 = vrsqrt.pop %v136
  %v144 = vmul.f32 %v88, %v137
  %v145 = vmul.f32 %v89, %v138
  %v146 = vmul.f32 %v90, %v139
  %v147 = vmul.f32 %v91, %v140
  %v148 = vmul.f32 %v92, %v141
  %v149 = vmul.f32 %v93, %v142
  %v150 = vmul.f32 %v94, %v143
  %v152 = vlaneseq
  %v153 = vshrl.u32 %v152, 7
  %v154 = vsub.s32 0, %v153
  %v155 = vrot.slane %v14, %v154
  %v157 = vmul.f32 %v144, %v155
  %v158 = vmul.f32 %v145, %v155
  %v159 = vmul.f32 %v146, %v155
  %v160 = vmul.f32 %v147, %v155
  %v161 = vmul.f32 %v148, %v155
  %v162 = vmul.f32 %v149, %v155
  %v163 = vmul.f32 %v150, %v155
  %v165 = vlaneseq
  %v166 = vshrl.u32 %v165, 7
  %v167 = vsub.s32 0, %v166
  %v168 = vrot.slane %v15, %v167
  %v170 = vadd.f32 %v157, %v168
  %v171 = vadd.f32 %v158, %v168
  %v172 = vadd.f32 %v159, %v168
  %v173 = vadd.f32 %v160, %v168
  %v174 = vadd.f32 %v161, %v168
  %v175 = vadd.f32 %v162, %v168
  %v176 = vadd.f32 %v163, %v168
  %v178 = vsel %vm58, %v43, 0
  %v181 = vsel %vm58, %v44, 0
  %v184 = vsel %vm58, %v45, 0
  %v187 = vsel %vm58, %v46, 0
  %v190 = vsel %vm58, %v47, 0
  %v193 = vsel %vm58, %v48, 0
  %v196 = vsel %vm58, %v49, 0
  %v199 = vsel %vm58, %v50, 0
  %v202 = vsel %vm58, %v170, 0
  %v205 = vsel %vm58, %v171, 0
  %v208 = vsel %vm58, %v172, 0
  %v211 = vsel %vm58, %v173, 0
  %v214 = vsel %vm58, %v174, 0
  %v217 = vsel %vm58, %v175, 0
  %v220 = vsel %vm58, %v176, 0
  %222 = vmatprep.subr.mxu0 0.0
  %v223 = vand.u32 %v202, 4294901760
  %224 = vmatpush1.xpose.msra.mxu0 %v223
  %225 = vmatprep.subr.mxu0 0.0
  %v226 = vand.u32 %v205, 4294901760
  %227 = vmatpush1.xpose.msra.mxu0 %v226
  %228 = vmatprep.subr.mxu0 0.0
  %v229 = vand.u32 %v208, 4294901760
  %230 = vmatpush1.xpose.msra.mxu0 %v229
  %231 = vmatprep.subr.mxu0 0.0
  %v232 = vand.u32 %v211, 4294901760
  %233 = vmatpush1.xpose.msra.mxu0 %v232
  %234 = vmatprep.subr.mxu0 0.0
  %v235 = vand.u32 %v214, 4294901760
  %236 = vmatpush1.xpose.msra.mxu0 %v235
  %237 = vmatprep.subr.mxu0 0.0
  %v238 = vand.u32 %v217, 4294901760
  %239 = vmatpush1.xpose.msra.mxu0 %v238
  %240 = vmatprep.subr.mxu0 0.0
  %v241 = vand.u32 %v220, 4294901760
  %242 = vmatpush1.xpose.msra.mxu0 %v241
  %243 = vmatprep.subr.mxu0 0.0
  %244 = vmatpush1.xpose.msra.mxu0 0.0
  %245 = vmatprep.subr.mxu0 0.0
  %246 = vmatpush1.xpose.msra.mxu0 0.0
  %247 = vmatprep.subr.mxu0 0.0
  %248 = vmatpush1.xpose.msra.mxu0 0.0
  %249 = vmatprep.subr.mxu0 0.0
  %250 = vmatpush1.xpose.msra.mxu0 0.0
  %251 = vmatprep.subr.mxu0 0.0
  %252 = vmatpush1.xpose.msra.mxu0 0.0
  %253 = vmatprep.subr.mxu0 0.0
  %254 = vmatpush1.xpose.msra.mxu0 0.0
  %255 = vmatprep.subr.mxu0 0.0
  %256 = vmatpush1.xpose.msra.mxu0 0.0
  %257 = vmatprep.subr.mxu0 0.0
  %258 = vmatpush1.xpose.msra.mxu0 0.0
  %259 = vmatprep.subr.mxu0 0.0
  %260 = vmatpush1.xpose.msra.mxu0 0.0
  %261 = vmatprep.subr.mxu0 0.0
  %262 = vmatpush1.xpose.msra.mxu0 0.0
  %263 = vmatprep.subr.mxu0 0.0
  %264 = vmatpush1.xpose.msra.mxu0 0.0
  %265 = vmatprep.subr.mxu0 0.0
  %266 = vmatpush1.xpose.msra.mxu0 0.0
  %267 = vmatprep.subr.mxu0 0.0
  %268 = vmatpush1.xpose.msra.mxu0 0.0
  %269 = vmatprep.subr.mxu0 0.0
  %270 = vmatpush1.xpose.msra.mxu0 0.0
  %271 = vmatprep.subr.mxu0 0.0
  %272 = vmatpush1.xpose.msra.mxu0 0.0
  %273 = vmatprep.subr.mxu0 0.0
  %274 = vmatpush1.xpose.msra.mxu0 0.0
  %275 = vmatprep.subr.mxu0 0.0
  %276 = vmatpush1.xpose.msra.mxu0 0.0
  %277 = vmatprep.subr.mxu0 0.0
  %278 = vmatpush1.xpose.msra.mxu0 0.0
  %279 = vmatprep.subr.mxu0 0.0
  %280 = vmatpush1.xpose.msra.mxu0 0.0
  %281 = vmatprep.subr.mxu0 0.0
  %282 = vmatpush1.xpose.msra.mxu0 0.0
  %283 = vmatprep.subr.mxu0 0.0
  %284 = vmatpush1.xpose.msra.mxu0 0.0
  %285 = vmatprep.subr.mxu0 0.0
  %286 = vmatpush1.xpose.msra.mxu0 0.0
  %287 = vmatprep.subr.mxu0 0.0
  %288 = vmatpush1.xpose.msra.mxu0 0.0
  %289 = vmatprep.subr.mxu0 0.0
  %290 = vmatpush1.xpose.msra.mxu0 0.0
  %291 = vmatprep.subr.mxu0 0.0
  %292 = vmatpush1.xpose.msra.mxu0 0.0
  %293 = vmatprep.mubr.f32.mxu0 0.0
  %v294 = vand.u32 %v178, 4294901760
  %v295 = vsub.f32 %v178, %v294
  %v296 = vand.u32 %v295, 4294901760
  %v297 = vsub.f32 %v295, %v296
  %v298 = vand.u32 %v297, 4294901760
  %299 = vmatmul.mubr.f32.gmra.mrb[0].mxu0 %v298
  %v300 = vpop.f32.mrb[0].mxu0
  %v301 = vadd.f32 0.0, %v300
  %v302 = vpop.f32.mrb[0].mxu0
  %303 = vmatprep.mubr.f32.mxu0 0.0
  %v304 = vand.u32 %v181, 4294901760
  %v305 = vsub.f32 %v181, %v304
  %v306 = vand.u32 %v305, 4294901760
  %v307 = vsub.f32 %v305, %v306
  %v308 = vand.u32 %v307, 4294901760
  %309 = vmatmul.mubr.f32.gmra.mrb[0].mxu0 %v308
  %v310 = vpop.f32.mrb[0].mxu0
  %v311 = vadd.f32 0.0, %v310
  %v312 = vpop.f32.mrb[0].mxu0
  %313 = vmatprep.mubr.f32.mxu0 0.0
  %v314 = vand.u32 %v184, 4294901760
  %v315 = vsub.f32 %v184, %v314
  %v316 = vand.u32 %v315, 4294901760
  %v317 = vsub.f32 %v315, %v316
  %v318 = vand.u32 %v317, 4294901760
  %319 = vmatmul.mubr.f32.gmra.mrb[0].mxu0 %v318
  %v320 = vpop.f32.mrb[0].mxu0
  %v321 = vadd.f32 0.0, %v320
  %v322 = vpop.f32.mrb[0].mxu0
  %323 = vmatprep.mubr.f32.mxu0 0.0
  %v324 = vand.u32 %v187, 4294901760
  %v325 = vsub.f32 %v187, %v324
  %v326 = vand.u32 %v325, 4294901760
  %v327 = vsub.f32 %v325, %v326
  %v328 = vand.u32 %v327, 4294901760
  %329 = vmatmul.mubr.f32.gmra.mrb[0].mxu0 %v328
  %v330 = vpop.f32.mrb[0].mxu0
  %v331 = vadd.f32 0.0, %v330
  %v332 = vpop.f32.mrb[0].mxu0
  %333 = vmatprep.mubr.f32.mxu0 0.0
  %v334 = vand.u32 %v190, 4294901760
  %v335 = vsub.f32 %v190, %v334
  %v336 = vand.u32 %v335, 4294901760
  %v337 = vsub.f32 %v335, %v336
  %v338 = vand.u32 %v337, 4294901760
  %339 = vmatmul.mubr.f32.gmra.mrb[0].mxu0 %v338
  %v340 = vpop.f32.mrb[0].mxu0
  %v341 = vadd.f32 0.0, %v340
  %v342 = vpop.f32.mrb[0].mxu0
  %343 = vmatprep.mubr.f32.mxu0 0.0
  %v344 = vand.u32 %v193, 4294901760
  %v345 = vsub.f32 %v193, %v344
  %v346 = vand.u32 %v345, 4294901760
  %v347 = vsub.f32 %v345, %v346
  %v348 = vand.u32 %v347, 4294901760
  %349 = vmatmul.mubr.f32.gmra.mrb[0].mxu0 %v348
  %v350 = vpop.f32.mrb[0].mxu0
  %v351 = vadd.f32 0.0, %v350
  %v352 = vpop.f32.mrb[0].mxu0
  %353 = vmatprep.mubr.f32.mxu0 0.0
  %v354 = vand.u32 %v196, 4294901760
  %v355 = vsub.f32 %v196, %v354
  %v356 = vand.u32 %v355, 4294901760
  %v357 = vsub.f32 %v355, %v356
  %v358 = vand.u32 %v357, 4294901760
  %359 = vmatmul.mubr.f32.gmra.mrb[0].mxu0 %v358
  %v360 = vpop.f32.mrb[0].mxu0
  %v361 = vadd.f32 0.0, %v360
  %v362 = vpop.f32.mrb[0].mxu0
  %363 = vmatprep.mubr.f32.mxu0 0.0
  %v364 = vand.u32 %v199, 4294901760
  %v365 = vsub.f32 %v199, %v364
  %v366 = vand.u32 %v365, 4294901760
  %v367 = vsub.f32 %v365, %v366
  %v368 = vand.u32 %v367, 4294901760
  %369 = vmatmul.mubr.f32.gmra.mrb[0].mxu0 %v368
  %v370 = vpop.f32.mrb[0].mxu0
  %v371 = vadd.f32 0.0, %v370
  %v372 = vpop.f32.mrb[0].mxu0
  %373 = vdwg.mxu0
  %374 = vmatprep.subr.mxu0 0.0
  %v375 = vand.u32 %v202, 4294901760
  %v376 = vsub.f32 %v202, %v375
  %v377 = vand.u32 %v376, 4294901760
  %v378 = vsub.f32 %v376, %v377
  %v379 = vand.u32 %v378, 4294901760
  %380 = vmatpush1.xpose.msra.mxu0 %v379
  %381 = vmatprep.subr.mxu0 0.0
  %v382 = vand.u32 %v205, 4294901760
  %v383 = vsub.f32 %v205, %v382
  %v384 = vand.u32 %v383, 4294901760
  %v385 = vsub.f32 %v383, %v384
  %v386 = vand.u32 %v385, 4294901760
  %387 = vmatpush1.xpose.msra.mxu0 %v386
  %388 = vmatprep.subr.mxu0 0.0
  %v389 = vand.u32 %v208, 4294901760
  %v390 = vsub.f32 %v208, %v389
  %v391 = vand.u32 %v390, 4294901760
  %v392 = vsub.f32 %v390, %v391
  %v393 = vand.u32 %v392, 4294901760
  %394 = vmatpush1.xpose.msra.mxu0 %v393
  %395 = vmatprep.subr.mxu0 0.0
  %v396 = vand.u32 %v211, 4294901760
  %v397 = vsub.f32 %v211, %v396
  %v398 = vand.u32 %v397, 4294901760
  %v399 = vsub.f32 %v397, %v398
  %v400 = vand.u32 %v399, 4294901760
  %401 = vmatpush1.xpose.msra.mxu0 %v400
  %402 = vmatprep.subr.mxu0 0.0
  %v403 = vand.u32 %v214, 4294901760
  %v404 = vsub.f32 %v214, %v403
  %v405 = vand.u32 %v404, 4294901760
  %v406 = vsub.f32 %v404, %v405
  %v407 = vand.u32 %v406, 4294901760
  %408 = vmatpush1.xpose.msra.mxu0 %v407
  %409 = vmatprep.subr.mxu0 0.0
  %v410 = vand.u32 %v217, 4294901760
  %v411 = vsub.f32 %v217, %v410
  %v412 = vand.u32 %v411, 4294901760
  %v413 = vsub.f32 %v411, %v412
  %v414 = vand.u32 %v413, 4294901760
  %415 = vmatpush1.xpose.msra.mxu0 %v414
  %416 = vmatprep.subr.mxu0 0.0
  %v417 = vand.u32 %v220, 4294901760
  %v418 = vsub.f32 %v220, %v417
  %v419 = vand.u32 %v418, 4294901760
  %v420 = vsub.f32 %v418, %v419
  %v421 = vand.u32 %v420, 4294901760
  %422 = vmatpush1.xpose.msra.mxu0 %v421
  %423 = vmatprep.subr.mxu0 0.0
  %424 = vmatpush1.xpose.msra.mxu0 0.0
  %425 = vmatprep.subr.mxu0 0.0
  %426 = vmatpush1.xpose.msra.mxu0 0.0
  %427 = vmatprep.subr.mxu0 0.0
  %428 = vmatpush1.xpose.msra.mxu0 0.0
  %429 = vmatprep.subr.mxu0 0.0
  %430 = vmatpush1.xpose.msra.mxu0 0.0
  %431 = vmatprep.subr.mxu0 0.0
  %432 = vmatpush1.xpose.msra.mxu0 0.0
  %433 = vmatprep.subr.mxu0 0.0
  %434 = vmatpush1.xpose.msra.mxu0 0.0
  %435 = vmatprep.subr.mxu0 0.0
  %436 = vmatpush1.xpose.msra.mxu0 0.0
  %437 = vmatprep.subr.mxu0 0.0
  %438 = vmatpush1.xpose.msra.mxu0 0.0
  %439 = vmatprep.subr.mxu0 0.0
  %440 = vmatpush1.xpose.msra.mxu0 0.0
  %441 = vmatprep.subr.mxu0 0.0
  %442 = vmatpush1.xpose.msra.mxu0 0.0
  %443 = vmatprep.subr.mxu0 0.0
  %444 = vmatpush1.xpose.msra.mxu0 0.0
  %445 = vmatprep.subr.mxu0 0.0
  %446 = vmatpush1.xpose.msra.mxu0 0.0
  %447 = vmatprep.subr.mxu0 0.0
  %448 = vmatpush1.xpose.msra.mxu0 0.0
  %449 = vmatprep.subr.mxu0 0.0
  %450 = vmatpush1.xpose.msra.mxu0 0.0
  %451 = vmatprep.subr.mxu0 0.0
  %452 = vmatpush1.xpose.msra.mxu0 0.0
  %453 = vmatprep.subr.mxu0 0.0
  %454 = vmatpush1.xpose.msra.mxu0 0.0
  %455 = vmatprep.subr.mxu0 0.0
  %456 = vmatpush1.xpose.msra.mxu0 0.0
  %457 = vmatprep.subr.mxu0 0.0
  %458 = vmatpush1.xpose.msra.mxu0 0.0
  %459 = vmatprep.subr.mxu0 0.0
  %460 = vmatpush1.xpose.msra.mxu0 0.0
  %461 = vmatprep.subr.mxu0 0.0
  %462 = vmatpush1.xpose.msra.mxu0 0.0
  %463 = vmatprep.subr.mxu0 0.0
  %464 = vmatpush1.xpose.msra.mxu0 0.0
  %465 = vmatprep.subr.mxu0 0.0
  %466 = vmatpush1.xpose.msra.mxu0 0.0
  %467 = vmatprep.subr.mxu0 0.0
  %468 = vmatpush1.xpose.msra.mxu0 0.0
  %469 = vmatprep.subr.mxu0 0.0
  %470 = vmatpush1.xpose.msra.mxu0 0.0
  %471 = vmatprep.subr.mxu0 0.0
  %472 = vmatpush1.xpose.msra.mxu0 0.0
  %473 = vmatprep.mubr.f32.mxu0 0.0
  %v474 = vand.u32 %v178, 4294901760
  %475 = vmatmul.mubr.f32.gmra.mrb[0].mxu0 %v474
  %v476 = vpop.f32.mrb[0].mxu0
  %v477 = vadd.f32 %v301, %v476
  %v478 = vpop.f32.mrb[0].mxu0
  %479 = vmatprep.mubr.f32.mxu0 0.0
  %v480 = vand.u32 %v181, 4294901760
  %481 = vmatmul.mubr.f32.gmra.mrb[0].mxu0 %v480
  %v482 = vpop.f32.mrb[0].mxu0
  %v483 = vadd.f32 %v311, %v482
  %v484 = vpop.f32.mrb[0].mxu0
  %485 = vmatprep.mubr.f32.mxu0 0.0
  %v486 = vand.u32 %v184, 4294901760
  %487 = vmatmul.mubr.f32.gmra.mrb[0].mxu0 %v486
  %v488 = vpop.f32.mrb[0].mxu0
  %v489 = vadd.f32 %v321, %v488
  %v490 = vpop.f32.mrb[0].mxu0
  %491 = vmatprep.mubr.f32.mxu0 0.0
  %v492 = vand.u32 %v187, 4294901760
  %493 = vmatmul.mubr.f32.gmra.mrb[0].mxu0 %v492
  %v494 = vpop.f32.mrb[0].mxu0
  %v495 = vadd.f32 %v331, %v494
  %v496 = vpop.f32.mrb[0].mxu0
  %497 = vmatprep.mubr.f32.mxu0 0.0
  %v498 = vand.u32 %v190, 4294901760
  %499 = vmatmul.mubr.f32.gmra.mrb[0].mxu0 %v498
  %v500 = vpop.f32.mrb[0].mxu0
  %v501 = vadd.f32 %v341, %v500
  %v502 = vpop.f32.mrb[0].mxu0
  %503 = vmatprep.mubr.f32.mxu0 0.0
  %v504 = vand.u32 %v193, 4294901760
  %505 = vmatmul.mubr.f32.gmra.mrb[0].mxu0 %v504
  %v506 = vpop.f32.mrb[0].mxu0
  %v507 = vadd.f32 %v351, %v506
  %v508 = vpop.f32.mrb[0].mxu0
  %509 = vmatprep.mubr.f32.mxu0 0.0
  %v510 = vand.u32 %v196, 4294901760
  %511 = vmatmul.mubr.f32.gmra.mrb[0].mxu0 %v510
  %v512 = vpop.f32.mrb[0].mxu0
  %v513 = vadd.f32 %v361, %v512
  %v514 = vpop.f32.mrb[0].mxu0
  %515 = vmatprep.mubr.f32.mxu0 0.0
  %v516 = vand.u32 %v199, 4294901760
  %517 = vmatmul.mubr.f32.gmra.mrb[0].mxu0 %v516
  %v518 = vpop.f32.mrb[0].mxu0
  %v519 = vadd.f32 %v371, %v518
  %v520 = vpop.f32.mrb[0].mxu0
  %521 = vdwg.mxu0
  %522 = vmatprep.subr.mxu0 0.0
  %v523 = vand.u32 %v202, 4294901760
  %v524 = vsub.f32 %v202, %v523
  %525 = vmatpush1.xpose.msra.mxu0 %v524
  %526 = vmatprep.subr.mxu0 0.0
  %v527 = vand.u32 %v205, 4294901760
  %v528 = vsub.f32 %v205, %v527
  %529 = vmatpush1.xpose.msra.mxu0 %v528
  %530 = vmatprep.subr.mxu0 0.0
  %v531 = vand.u32 %v208, 4294901760
  %v532 = vsub.f32 %v208, %v531
  %533 = vmatpush1.xpose.msra.mxu0 %v532
  %534 = vmatprep.subr.mxu0 0.0
  %v535 = vand.u32 %v211, 4294901760
  %v536 = vsub.f32 %v211, %v535
  %537 = vmatpush1.xpose.msra.mxu0 %v536
  %538 = vmatprep.subr.mxu0 0.0
  %v539 = vand.u32 %v214, 4294901760
  %v540 = vsub.f32 %v214, %v539
  %541 = vmatpush1.xpose.msra.mxu0 %v540
  %542 = vmatprep.subr.mxu0 0.0
  %v543 = vand.u32 %v217, 4294901760
  %v544 = vsub.f32 %v217, %v543
  %545 = vmatpush1.xpose.msra.mxu0 %v544
  %546 = vmatprep.subr.mxu0 0.0
  %v547 = vand.u32 %v220, 4294901760
  %v548 = vsub.f32 %v220, %v547
  %549 = vmatpush1.xpose.msra.mxu0 %v548
  %550 = vmatprep.subr.mxu0 0.0
  %551 = vmatpush1.xpose.msra.mxu0 0.0
  %552 = vmatprep.subr.mxu0 0.0
  %553 = vmatpush1.xpose.msra.mxu0 0.0
  %554 = vmatprep.subr.mxu0 0.0
  %555 = vmatpush1.xpose.msra.mxu0 0.0
  %556 = vmatprep.subr.mxu0 0.0
  %557 = vmatpush1.xpose.msra.mxu0 0.0
  %558 = vmatprep.subr.mxu0 0.0
  %559 = vmatpush1.xpose.msra.mxu0 0.0
  %560 = vmatprep.subr.mxu0 0.0
  %561 = vmatpush1.xpose.msra.mxu0 0.0
  %562 = vmatprep.subr.mxu0 0.0
  %563 = vmatpush1.xpose.msra.mxu0 0.0
  %564 = vmatprep.subr.mxu0 0.0
  %565 = vmatpush1.xpose.msra.mxu0 0.0
  %566 = vmatprep.subr.mxu0 0.0
  %567 = vmatpush1.xpose.msra.mxu0 0.0
  %568 = vmatprep.subr.mxu0 0.0
  %569 = vmatpush1.xpose.msra.mxu0 0.0
  %570 = vmatprep.subr.mxu0 0.0
  %571 = vmatpush1.xpose.msra.mxu0 0.0
  %572 = vmatprep.subr.mxu0 0.0
  %573 = vmatpush1.xpose.msra.mxu0 0.0
  %574 = vmatprep.subr.mxu0 0.0
  %575 = vmatpush1.xpose.msra.mxu0 0.0
  %576 = vmatprep.subr.mxu0 0.0
  %577 = vmatpush1.xpose.msra.mxu0 0.0
  %578 = vmatprep.subr.mxu0 0.0
  %579 = vmatpush1.xpose.msra.mxu0 0.0
  %580 = vmatprep.subr.mxu0 0.0
  %581 = vmatpush1.xpose.msra.mxu0 0.0
  %582 = vmatprep.subr.mxu0 0.0
  %583 = vmatpush1.xpose.msra.mxu0 0.0
  %584 = vmatprep.subr.mxu0 0.0
  %585 = vmatpush1.xpose.msra.mxu0 0.0
  %586 = vmatprep.subr.mxu0 0.0
  %587 = vmatpush1.xpose.msra.mxu0 0.0
  %588 = vmatprep.subr.mxu0 0.0
  %589 = vmatpush1.xpose.msra.mxu0 0.0
  %590 = vmatprep.subr.mxu0 0.0
  %591 = vmatpush1.xpose.msra.mxu0 0.0
  %592 = vmatprep.subr.mxu0 0.0
  %593 = vmatpush1.xpose.msra.mxu0 0.0
  %594 = vmatprep.subr.mxu0 0.0
  %595 = vmatpush1.xpose.msra.mxu0 0.0
  %596 = vmatprep.subr.mxu0 0.0
  %597 = vmatpush1.xpose.msra.mxu0 0.0
  %598 = vmatprep.subr.mxu0 0.0
  %599 = vmatpush1.xpose.msra.mxu0 0.0
  %600 = vmatprep.mubr.f32.mxu0 0.0
  %v601 = vand.u32 %v178, 4294901760
  %v602 = vsub.f32 %v178, %v601
  %603 = vmatmul.mubr.f32.gmra.mrb[0].mxu0 %v602
  %v604 = vpop.f32.mrb[0].mxu0
  %v605 = vadd.f32 %v477, %v604
  %v606 = vpop.f32.mrb[0].mxu0
  %607 = vmatprep.mubr.f32.mxu0 0.0
  %v608 = vand.u32 %v181, 4294901760
  %v609 = vsub.f32 %v181, %v608
  %610 = vmatmul.mubr.f32.gmra.mrb[0].mxu0 %v609
  %v611 = vpop.f32.mrb[0].mxu0
  %v612 = vadd.f32 %v483, %v611
  %v613 = vpop.f32.mrb[0].mxu0
  %614 = vmatprep.mubr.f32.mxu0 0.0
  %v615 = vand.u32 %v184, 4294901760
  %v616 = vsub.f32 %v184, %v615
  %617 = vmatmul.mubr.f32.gmra.mrb[0].mxu0 %v616
  %v618 = vpop.f32.mrb[0].mxu0
  %v619 = vadd.f32 %v489, %v618
  %v620 = vpop.f32.mrb[0].mxu0
  %621 = vmatprep.mubr.f32.mxu0 0.0
  %v622 = vand.u32 %v187, 4294901760
  %v623 = vsub.f32 %v187, %v622
  %624 = vmatmul.mubr.f32.gmra.mrb[0].mxu0 %v623
  %v625 = vpop.f32.mrb[0].mxu0
  %v626 = vadd.f32 %v495, %v625
  %v627 = vpop.f32.mrb[0].mxu0
  %628 = vmatprep.mubr.f32.mxu0 0.0
  %v629 = vand.u32 %v190, 4294901760
  %v630 = vsub.f32 %v190, %v629
  %631 = vmatmul.mubr.f32.gmra.mrb[0].mxu0 %v630
  %v632 = vpop.f32.mrb[0].mxu0
  %v633 = vadd.f32 %v501, %v632
  %v634 = vpop.f32.mrb[0].mxu0
  %635 = vmatprep.mubr.f32.mxu0 0.0
  %v636 = vand.u32 %v193, 4294901760
  %v637 = vsub.f32 %v193, %v636
  %638 = vmatmul.mubr.f32.gmra.mrb[0].mxu0 %v637
  %v639 = vpop.f32.mrb[0].mxu0
  %v640 = vadd.f32 %v507, %v639
  %v641 = vpop.f32.mrb[0].mxu0
  %642 = vmatprep.mubr.f32.mxu0 0.0
  %v643 = vand.u32 %v196, 4294901760
  %v644 = vsub.f32 %v196, %v643
  %645 = vmatmul.mubr.f32.gmra.mrb[0].mxu0 %v644
  %v646 = vpop.f32.mrb[0].mxu0
  %v647 = vadd.f32 %v513, %v646
  %v648 = vpop.f32.mrb[0].mxu0
  %649 = vmatprep.mubr.f32.mxu0 0.0
  %v650 = vand.u32 %v199, 4294901760
  %v651 = vsub.f32 %v199, %v650
  %652 = vmatmul.mubr.f32.gmra.mrb[0].mxu0 %v651
  %v653 = vpop.f32.mrb[0].mxu0
  %v654 = vadd.f32 %v519, %v653
  %v655 = vpop.f32.mrb[0].mxu0
  %656 = vdwg.mxu0
  %657 = vmatprep.subr.mxu0 0.0
  %v658 = vand.u32 %v202, 4294901760
  %659 = vmatpush1.xpose.msra.mxu0 %v658
  %660 = vmatprep.subr.mxu0 0.0
  %v661 = vand.u32 %v205, 4294901760
  %662 = vmatpush1.xpose.msra.mxu0 %v661
  %663 = vmatprep.subr.mxu0 0.0
  %v664 = vand.u32 %v208, 4294901760
  %665 = vmatpush1.xpose.msra.mxu0 %v664
  %666 = vmatprep.subr.mxu0 0.0
  %v667 = vand.u32 %v211, 4294901760
  %668 = vmatpush1.xpose.msra.mxu0 %v667
  %669 = vmatprep.subr.mxu0 0.0
  %v670 = vand.u32 %v214, 4294901760
  %671 = vmatpush1.xpose.msra.mxu0 %v670
  %672 = vmatprep.subr.mxu0 0.0
  %v673 = vand.u32 %v217, 4294901760
  %674 = vmatpush1.xpose.msra.mxu0 %v673
  %675 = vmatprep.subr.mxu0 0.0
  %v676 = vand.u32 %v220, 4294901760
  %677 = vmatpush1.xpose.msra.mxu0 %v676
  %678 = vmatprep.subr.mxu0 0.0
  %679 = vmatpush1.xpose.msra.mxu0 0.0
  %680 = vmatprep.subr.mxu0 0.0
  %681 = vmatpush1.xpose.msra.mxu0 0.0
  %682 = vmatprep.subr.mxu0 0.0
  %683 = vmatpush1.xpose.msra.mxu0 0.0
  %684 = vmatprep.subr.mxu0 0.0
  %685 = vmatpush1.xpose.msra.mxu0 0.0
  %686 = vmatprep.subr.mxu0 0.0
  %687 = vmatpush1.xpose.msra.mxu0 0.0
  %688 = vmatprep.subr.mxu0 0.0
  %689 = vmatpush1.xpose.msra.mxu0 0.0
  %690 = vmatprep.subr.mxu0 0.0
  %691 = vmatpush1.xpose.msra.mxu0 0.0
  %692 = vmatprep.subr.mxu0 0.0
  %693 = vmatpush1.xpose.msra.mxu0 0.0
  %694 = vmatprep.subr.mxu0 0.0
  %695 = vmatpush1.xpose.msra.mxu0 0.0
  %696 = vmatprep.subr.mxu0 0.0
  %697 = vmatpush1.xpose.msra.mxu0 0.0
  %698 = vmatprep.subr.mxu0 0.0
  %699 = vmatpush1.xpose.msra.mxu0 0.0
  %700 = vmatprep.subr.mxu0 0.0
  %701 = vmatpush1.xpose.msra.mxu0 0.0
  %702 = vmatprep.subr.mxu0 0.0
  %703 = vmatpush1.xpose.msra.mxu0 0.0
  %704 = vmatprep.subr.mxu0 0.0
  %705 = vmatpush1.xpose.msra.mxu0 0.0
  %706 = vmatprep.subr.mxu0 0.0
  %707 = vmatpush1.xpose.msra.mxu0 0.0
  %708 = vmatprep.subr.mxu0 0.0
  %709 = vmatpush1.xpose.msra.mxu0 0.0
  %710 = vmatprep.subr.mxu0 0.0
  %711 = vmatpush1.xpose.msra.mxu0 0.0
  %712 = vmatprep.subr.mxu0 0.0
  %713 = vmatpush1.xpose.msra.mxu0 0.0
  %714 = vmatprep.subr.mxu0 0.0
  %715 = vmatpush1.xpose.msra.mxu0 0.0
  %716 = vmatprep.subr.mxu0 0.0
  %717 = vmatpush1.xpose.msra.mxu0 0.0
  %718 = vmatprep.subr.mxu0 0.0
  %719 = vmatpush1.xpose.msra.mxu0 0.0
  %720 = vmatprep.subr.mxu0 0.0
  %721 = vmatpush1.xpose.msra.mxu0 0.0
  %722 = vmatprep.subr.mxu0 0.0
  %723 = vmatpush1.xpose.msra.mxu0 0.0
  %724 = vmatprep.subr.mxu0 0.0
  %725 = vmatpush1.xpose.msra.mxu0 0.0
  %726 = vmatprep.subr.mxu0 0.0
  %727 = vmatpush1.xpose.msra.mxu0 0.0
  %728 = vmatprep.mubr.f32.mxu0 0.0
  %v729 = vand.u32 %v178, 4294901760
  %v730 = vsub.f32 %v178, %v729
  %v731 = vand.u32 %v730, 4294901760
  %732 = vmatmul.mubr.f32.gmra.mrb[0].mxu0 %v731
  %v733 = vpop.f32.mrb[0].mxu0
  %v734 = vadd.f32 %v605, %v733
  %v735 = vpop.f32.mrb[0].mxu0
  %736 = vmatprep.mubr.f32.mxu0 0.0
  %v737 = vand.u32 %v181, 4294901760
  %v738 = vsub.f32 %v181, %v737
  %v739 = vand.u32 %v738, 4294901760
  %740 = vmatmul.mubr.f32.gmra.mrb[0].mxu0 %v739
  %v741 = vpop.f32.mrb[0].mxu0
  %v742 = vadd.f32 %v612, %v741
  %v743 = vpop.f32.mrb[0].mxu0
  %744 = vmatprep.mubr.f32.mxu0 0.0
  %v745 = vand.u32 %v184, 4294901760
  %v746 = vsub.f32 %v184, %v745
  %v747 = vand.u32 %v746, 4294901760
  %748 = vmatmul.mubr.f32.gmra.mrb[0].mxu0 %v747
  %v749 = vpop.f32.mrb[0].mxu0
  %v750 = vadd.f32 %v619, %v749
  %v751 = vpop.f32.mrb[0].mxu0
  %752 = vmatprep.mubr.f32.mxu0 0.0
  %v753 = vand.u32 %v187, 4294901760
  %v754 = vsub.f32 %v187, %v753
  %v755 = vand.u32 %v754, 4294901760
  %756 = vmatmul.mubr.f32.gmra.mrb[0].mxu0 %v755
  %v757 = vpop.f32.mrb[0].mxu0
  %v758 = vadd.f32 %v626, %v757
  %v759 = vpop.f32.mrb[0].mxu0
  %760 = vmatprep.mubr.f32.mxu0 0.0
  %v761 = vand.u32 %v190, 4294901760
  %v762 = vsub.f32 %v190, %v761
  %v763 = vand.u32 %v762, 4294901760
  %764 = vmatmul.mubr.f32.gmra.mrb[0].mxu0 %v763
  %v765 = vpop.f32.mrb[0].mxu0
  %v766 = vadd.f32 %v633, %v765
  %v767 = vpop.f32.mrb[0].mxu0
  %768 = vmatprep.mubr.f32.mxu0 0.0
  %v769 = vand.u32 %v193, 4294901760
  %v770 = vsub.f32 %v193, %v769
  %v771 = vand.u32 %v770, 4294901760
  %772 = vmatmul.mubr.f32.gmra.mrb[0].mxu0 %v771
  %v773 = vpop.f32.mrb[0].mxu0
  %v774 = vadd.f32 %v640, %v773
  %v775 = vpop.f32.mrb[0].mxu0
  %776 = vmatprep.mubr.f32.mxu0 0.0
  %v777 = vand.u32 %v196, 4294901760
  %v778 = vsub.f32 %v196, %v777
  %v779 = vand.u32 %v778, 4294901760
  %780 = vmatmul.mubr.f32.gmra.mrb[0].mxu0 %v779
  %v781 = vpop.f32.mrb[0].mxu0
  %v782 = vadd.f32 %v647, %v781
  %v783 = vpop.f32.mrb[0].mxu0
  %784 = vmatprep.mubr.f32.mxu0 0.0
  %v785 = vand.u32 %v199, 4294901760
  %v786 = vsub.f32 %v199, %v785
  %v787 = vand.u32 %v786, 4294901760
  %788 = vmatmul.mubr.f32.gmra.mrb[0].mxu0 %v787
  %v789 = vpop.f32.mrb[0].mxu0
  %v790 = vadd.f32 %v654, %v789
  %v791 = vpop.f32.mrb[0].mxu0
  %792 = vdwg.mxu0
  %793 = vmatprep.subr.mxu0 0.0
  %v794 = vand.u32 %v202, 4294901760
  %v795 = vsub.f32 %v202, %v794
  %v796 = vand.u32 %v795, 4294901760
  %797 = vmatpush1.xpose.msra.mxu0 %v796
  %798 = vmatprep.subr.mxu0 0.0
  %v799 = vand.u32 %v205, 4294901760
  %v800 = vsub.f32 %v205, %v799
  %v801 = vand.u32 %v800, 4294901760
  %802 = vmatpush1.xpose.msra.mxu0 %v801
  %803 = vmatprep.subr.mxu0 0.0
  %v804 = vand.u32 %v208, 4294901760
  %v805 = vsub.f32 %v208, %v804
  %v806 = vand.u32 %v805, 4294901760
  %807 = vmatpush1.xpose.msra.mxu0 %v806
  %808 = vmatprep.subr.mxu0 0.0
  %v809 = vand.u32 %v211, 4294901760
  %v810 = vsub.f32 %v211, %v809
  %v811 = vand.u32 %v810, 4294901760
  %812 = vmatpush1.xpose.msra.mxu0 %v811
  %813 = vmatprep.subr.mxu0 0.0
  %v814 = vand.u32 %v214, 4294901760
  %v815 = vsub.f32 %v214, %v814
  %v816 = vand.u32 %v815, 4294901760
  %817 = vmatpush1.xpose.msra.mxu0 %v816
  %818 = vmatprep.subr.mxu0 0.0
  %v819 = vand.u32 %v217, 4294901760
  %v820 = vsub.f32 %v217, %v819
  %v821 = vand.u32 %v820, 4294901760
  %822 = vmatpush1.xpose.msra.mxu0 %v821
  %823 = vmatprep.subr.mxu0 0.0
  %v824 = vand.u32 %v220, 4294901760
  %v825 = vsub.f32 %v220, %v824
  %v826 = vand.u32 %v825, 4294901760
  %827 = vmatpush1.xpose.msra.mxu0 %v826
  %828 = vmatprep.subr.mxu0 0.0
  %829 = vmatpush1.xpose.msra.mxu0 0.0
  %830 = vmatprep.subr.mxu0 0.0
  %831 = vmatpush1.xpose.msra.mxu0 0.0
  %832 = vmatprep.subr.mxu0 0.0
  %833 = vmatpush1.xpose.msra.mxu0 0.0
  %834 = vmatprep.subr.mxu0 0.0
  %835 = vmatpush1.xpose.msra.mxu0 0.0
  %836 = vmatprep.subr.mxu0 0.0
  %837 = vmatpush1.xpose.msra.mxu0 0.0
  %838 = vmatprep.subr.mxu0 0.0
  %839 = vmatpush1.xpose.msra.mxu0 0.0
  %840 = vmatprep.subr.mxu0 0.0
  %841 = vmatpush1.xpose.msra.mxu0 0.0
  %842 = vmatprep.subr.mxu0 0.0
  %843 = vmatpush1.xpose.msra.mxu0 0.0
  %844 = vmatprep.subr.mxu0 0.0
  %845 = vmatpush1.xpose.msra.mxu0 0.0
  %846 = vmatprep.subr.mxu0 0.0
  %847 = vmatpush1.xpose.msra.mxu0 0.0
  %848 = vmatprep.subr.mxu0 0.0
  %849 = vmatpush1.xpose.msra.mxu0 0.0
  %850 = vmatprep.subr.mxu0 0.0
  %851 = vmatpush1.xpose.msra.mxu0 0.0
  %852 = vmatprep.subr.mxu0 0.0
  %853 = vmatpush1.xpose.msra.mxu0 0.0
  %854 = vmatprep.subr.mxu0 0.0
  %855 = vmatpush1.xpose.msra.mxu0 0.0
  %856 = vmatprep.subr.mxu0 0.0
  %857 = vmatpush1.xpose.msra.mxu0 0.0
  %858 = vmatprep.subr.mxu0 0.0
  %859 = vmatpush1.xpose.msra.mxu0 0.0
  %860 = vmatprep.subr.mxu0 0.0
  %861 = vmatpush1.xpose.msra.mxu0 0.0
  %862 = vmatprep.subr.mxu0 0.0
  %863 = vmatpush1.xpose.msra.mxu0 0.0
  %864 = vmatprep.subr.mxu0 0.0
  %865 = vmatpush1.xpose.msra.mxu0 0.0
  %866 = vmatprep.subr.mxu0 0.0
  %867 = vmatpush1.xpose.msra.mxu0 0.0
  %868 = vmatprep.subr.mxu0 0.0
  %869 = vmatpush1.xpose.msra.mxu0 0.0
  %870 = vmatprep.subr.mxu0 0.0
  %871 = vmatpush1.xpose.msra.mxu0 0.0
  %872 = vmatprep.subr.mxu0 0.0
  %873 = vmatpush1.xpose.msra.mxu0 0.0
  %874 = vmatprep.subr.mxu0 0.0
  %875 = vmatpush1.xpose.msra.mxu0 0.0
  %876 = vmatprep.subr.mxu0 0.0
  %877 = vmatpush1.xpose.msra.mxu0 0.0
  %878 = vmatprep.mubr.f32.mxu0 0.0
  %v879 = vand.u32 %v178, 4294901760
  %880 = vmatmul.mubr.f32.gmra.mrb[0].mxu0 %v879
  %v881 = vpop.f32.mrb[0].mxu0
  %v882 = vadd.f32 %v734, %v881
  %v883 = vpop.f32.mrb[0].mxu0
  %884 = vmatprep.mubr.f32.mxu0 0.0
  %v885 = vand.u32 %v181, 4294901760
  %886 = vmatmul.mubr.f32.gmra.mrb[0].mxu0 %v885
  %v887 = vpop.f32.mrb[0].mxu0
  %v888 = vadd.f32 %v742, %v887
  %v889 = vpop.f32.mrb[0].mxu0
  %890 = vmatprep.mubr.f32.mxu0 0.0
  %v891 = vand.u32 %v184, 4294901760
  %892 = vmatmul.mubr.f32.gmra.mrb[0].mxu0 %v891
  %v893 = vpop.f32.mrb[0].mxu0
  %v894 = vadd.f32 %v750, %v893
  %v895 = vpop.f32.mrb[0].mxu0
  %896 = vmatprep.mubr.f32.mxu0 0.0
  %v897 = vand.u32 %v187, 4294901760
  %898 = vmatmul.mubr.f32.gmra.mrb[0].mxu0 %v897
  %v899 = vpop.f32.mrb[0].mxu0
  %v900 = vadd.f32 %v758, %v899
  %v901 = vpop.f32.mrb[0].mxu0
  %902 = vmatprep.mubr.f32.mxu0 0.0
  %v903 = vand.u32 %v190, 4294901760
  %904 = vmatmul.mubr.f32.gmra.mrb[0].mxu0 %v903
  %v905 = vpop.f32.mrb[0].mxu0
  %v906 = vadd.f32 %v766, %v905
  %v907 = vpop.f32.mrb[0].mxu0
  %908 = vmatprep.mubr.f32.mxu0 0.0
  %v909 = vand.u32 %v193, 4294901760
  %910 = vmatmul.mubr.f32.gmra.mrb[0].mxu0 %v909
  %v911 = vpop.f32.mrb[0].mxu0
  %v912 = vadd.f32 %v774, %v911
  %v913 = vpop.f32.mrb[0].mxu0
  %914 = vmatprep.mubr.f32.mxu0 0.0
  %v915 = vand.u32 %v196, 4294901760
  %916 = vmatmul.mubr.f32.gmra.mrb[0].mxu0 %v915
  %v917 = vpop.f32.mrb[0].mxu0
  %v918 = vadd.f32 %v782, %v917
  %v919 = vpop.f32.mrb[0].mxu0
  %920 = vmatprep.mubr.f32.mxu0 0.0
  %v921 = vand.u32 %v199, 4294901760
  %922 = vmatmul.mubr.f32.gmra.mrb[0].mxu0 %v921
  %v923 = vpop.f32.mrb[0].mxu0
  %v924 = vadd.f32 %v790, %v923
  %v925 = vpop.f32.mrb[0].mxu0
  %926 = vdwg.mxu0
  %927 = vmatprep.subr.mxu0 0.0
  %v928 = vand.u32 %v202, 4294901760
  %929 = vmatpush1.xpose.msra.mxu0 %v928
  %930 = vmatprep.subr.mxu0 0.0
  %v931 = vand.u32 %v205, 4294901760
  %932 = vmatpush1.xpose.msra.mxu0 %v931
  %933 = vmatprep.subr.mxu0 0.0
  %v934 = vand.u32 %v208, 4294901760
  %935 = vmatpush1.xpose.msra.mxu0 %v934
  %936 = vmatprep.subr.mxu0 0.0
  %v937 = vand.u32 %v211, 4294901760
  %938 = vmatpush1.xpose.msra.mxu0 %v937
  %939 = vmatprep.subr.mxu0 0.0
  %v940 = vand.u32 %v214, 4294901760
  %941 = vmatpush1.xpose.msra.mxu0 %v940
  %942 = vmatprep.subr.mxu0 0.0
  %v943 = vand.u32 %v217, 4294901760
  %944 = vmatpush1.xpose.msra.mxu0 %v943
  %945 = vmatprep.subr.mxu0 0.0
  %v946 = vand.u32 %v220, 4294901760
  %947 = vmatpush1.xpose.msra.mxu0 %v946
  %948 = vmatprep.subr.mxu0 0.0
  %949 = vmatpush1.xpose.msra.mxu0 0.0
  %950 = vmatprep.subr.mxu0 0.0
  %951 = vmatpush1.xpose.msra.mxu0 0.0
  %952 = vmatprep.subr.mxu0 0.0
  %953 = vmatpush1.xpose.msra.mxu0 0.0
  %954 = vmatprep.subr.mxu0 0.0
  %955 = vmatpush1.xpose.msra.mxu0 0.0
  %956 = vmatprep.subr.mxu0 0.0
  %957 = vmatpush1.xpose.msra.mxu0 0.0
  %958 = vmatprep.subr.mxu0 0.0
  %959 = vmatpush1.xpose.msra.mxu0 0.0
  %960 = vmatprep.subr.mxu0 0.0
  %961 = vmatpush1.xpose.msra.mxu0 0.0
  %962 = vmatprep.subr.mxu0 0.0
  %963 = vmatpush1.xpose.msra.mxu0 0.0
  %964 = vmatprep.subr.mxu0 0.0
  %965 = vmatpush1.xpose.msra.mxu0 0.0
  %966 = vmatprep.subr.mxu0 0.0
  %967 = vmatpush1.xpose.msra.mxu0 0.0
  %968 = vmatprep.subr.mxu0 0.0
  %969 = vmatpush1.xpose.msra.mxu0 0.0
  %970 = vmatprep.subr.mxu0 0.0
  %971 = vmatpush1.xpose.msra.mxu0 0.0
  %972 = vmatprep.subr.mxu0 0.0
  %973 = vmatpush1.xpose.msra.mxu0 0.0
  %974 = vmatprep.subr.mxu0 0.0
  %975 = vmatpush1.xpose.msra.mxu0 0.0
  %976 = vmatprep.subr.mxu0 0.0
  %977 = vmatpush1.xpose.msra.mxu0 0.0
  %978 = vmatprep.subr.mxu0 0.0
  %979 = vmatpush1.xpose.msra.mxu0 0.0
  %980 = vmatprep.subr.mxu0 0.0
  %981 = vmatpush1.xpose.msra.mxu0 0.0
  %982 = vmatprep.subr.mxu0 0.0
  %983 = vmatpush1.xpose.msra.mxu0 0.0
  %984 = vmatprep.subr.mxu0 0.0
  %985 = vmatpush1.xpose.msra.mxu0 0.0
  %986 = vmatprep.subr.mxu0 0.0
  %987 = vmatpush1.xpose.msra.mxu0 0.0
  %988 = vmatprep.subr.mxu0 0.0
  %989 = vmatpush1.xpose.msra.mxu0 0.0
  %990 = vmatprep.subr.mxu0 0.0
  %991 = vmatpush1.xpose.msra.mxu0 0.0
  %992 = vmatprep.subr.mxu0 0.0
  %993 = vmatpush1.xpose.msra.mxu0 0.0
  %994 = vmatprep.subr.mxu0 0.0
  %995 = vmatpush1.xpose.msra.mxu0 0.0
  %996 = vmatprep.subr.mxu0 0.0
  %997 = vmatpush1.xpose.msra.mxu0 0.0
  %998 = vmatprep.mubr.f32.mxu0 0.0
  %v999 = vand.u32 %v178, 4294901760
  %1000 = vmatmul.mubr.f32.gmra.mrb[0].mxu0 %v999
  %v1001 = vpop.f32.mrb[0].mxu0
  %v1002 = vadd.f32 %v882, %v1001
  %v1003 = vpop.f32.mrb[0].mxu0
  %1004 = vmatprep.mubr.f32.mxu0 0.0
  %v1005 = vand.u32 %v181, 4294901760
  %1006 = vmatmul.mubr.f32.gmra.mrb[0].mxu0 %v1005
  %v1007 = vpop.f32.mrb[0].mxu0
  %v1008 = vadd.f32 %v888, %v1007
  %v1009 = vpop.f32.mrb[0].mxu0
  %1010 = vmatprep.mubr.f32.mxu0 0.0
  %v1011 = vand.u32 %v184, 4294901760
  %1012 = vmatmul.mubr.f32.gmra.mrb[0].mxu0 %v1011
  %v1013 = vpop.f32.mrb[0].mxu0
  %v1014 = vadd.f32 %v894, %v1013
  %v1015 = vpop.f32.mrb[0].mxu0
  %1016 = vmatprep.mubr.f32.mxu0 0.0
  %v1017 = vand.u32 %v187, 4294901760
  %1018 = vmatmul.mubr.f32.gmra.mrb[0].mxu0 %v1017
  %v1019 = vpop.f32.mrb[0].mxu0
  %v1020 = vadd.f32 %v900, %v1019
  %v1021 = vpop.f32.mrb[0].mxu0
  %1022 = vmatprep.mubr.f32.mxu0 0.0
  %v1023 = vand.u32 %v190, 4294901760
  %1024 = vmatmul.mubr.f32.gmra.mrb[0].mxu0 %v1023
  %v1025 = vpop.f32.mrb[0].mxu0
  %v1026 = vadd.f32 %v906, %v1025
  %v1027 = vpop.f32.mrb[0].mxu0
  %1028 = vmatprep.mubr.f32.mxu0 0.0
  %v1029 = vand.u32 %v193, 4294901760
  %1030 = vmatmul.mubr.f32.gmra.mrb[0].mxu0 %v1029
  %v1031 = vpop.f32.mrb[0].mxu0
  %v1032 = vadd.f32 %v912, %v1031
  %v1033 = vpop.f32.mrb[0].mxu0
  %1034 = vmatprep.mubr.f32.mxu0 0.0
  %v1035 = vand.u32 %v196, 4294901760
  %1036 = vmatmul.mubr.f32.gmra.mrb[0].mxu0 %v1035
  %v1037 = vpop.f32.mrb[0].mxu0
  %v1038 = vadd.f32 %v918, %v1037
  %v1039 = vpop.f32.mrb[0].mxu0
  %1040 = vmatprep.mubr.f32.mxu0 0.0
  %v1041 = vand.u32 %v199, 4294901760
  %1042 = vmatmul.mubr.f32.gmra.mrb[0].mxu0 %v1041
  %v1043 = vpop.f32.mrb[0].mxu0
  %v1044 = vadd.f32 %v924, %v1043
  %v1045 = vpop.f32.mrb[0].mxu0
  %1046 = vdwg.mxu0
  %1048 = vset.pattern.permute.xlu0 0
  %1049 = vperm.xlu0 %1048, %v1002
  %v1050 = vpop.permute.xlu0 %1049
  %1052 = vset.pattern.permute.xlu0 0
  %1053 = vperm.xlu0 %1052, %v1008
  %v1054 = vpop.permute.xlu0 %1053
  %1056 = vset.pattern.permute.xlu0 0
  %1057 = vperm.xlu0 %1056, %v1014
  %v1058 = vpop.permute.xlu0 %1057
  %1060 = vset.pattern.permute.xlu0 0
  %1061 = vperm.xlu0 %1060, %v1020
  %v1062 = vpop.permute.xlu0 %1061
  %1064 = vset.pattern.permute.xlu0 0
  %1065 = vperm.xlu0 %1064, %v1026
  %v1066 = vpop.permute.xlu0 %1065
  %1068 = vset.pattern.permute.xlu0 0
  %1069 = vperm.xlu0 %1068, %v1032
  %v1070 = vpop.permute.xlu0 %1069
  %1072 = vset.pattern.permute.xlu0 0
  %1073 = vperm.xlu0 %1072, %v1038
  %v1074 = vpop.permute.xlu0 %1073
  %1076 = vset.pattern.permute.xlu0 0
  %1077 = vperm.xlu0 %1076, %v1044
  %v1078 = vpop.permute.xlu0 %1077
  %1079 = vrot.lane.b32.xlu0 %v1002, 127
  %v1080 = vpop.permute.xlu0 %1079
  %1081 = vrot.lane.b32.xlu0 %v1008, 127
  %v1082 = vpop.permute.xlu0 %1081
  %1083 = vrot.lane.b32.xlu0 %v1014, 127
  %v1084 = vpop.permute.xlu0 %1083
  %1085 = vrot.lane.b32.xlu0 %v1020, 127
  %v1086 = vpop.permute.xlu0 %1085
  %1087 = vrot.lane.b32.xlu0 %v1026, 127
  %v1088 = vpop.permute.xlu0 %1087
  %1089 = vrot.lane.b32.xlu0 %v1032, 127
  %v1090 = vpop.permute.xlu0 %1089
  %1091 = vrot.lane.b32.xlu0 %v1038, 127
  %v1092 = vpop.permute.xlu0 %1091
  %1093 = vrot.lane.b32.xlu0 %v1044, 127
  %v1094 = vpop.permute.xlu0 %1093
  %1095 = vrot.lane.b32.xlu0 %v1050, 127
  %v1096 = vpop.permute.xlu0 %1095
  %1097 = vrot.lane.b32.xlu0 %v1054, 127
  %v1098 = vpop.permute.xlu0 %1097
  %1099 = vrot.lane.b32.xlu0 %v1058, 127
  %v1100 = vpop.permute.xlu0 %1099
  %1101 = vrot.lane.b32.xlu0 %v1062, 127
  %v1102 = vpop.permute.xlu0 %1101
  %1103 = vrot.lane.b32.xlu0 %v1066, 127
  %v1104 = vpop.permute.xlu0 %1103
  %1105 = vrot.lane.b32.xlu0 %v1070, 127
  %v1106 = vpop.permute.xlu0 %1105
  %1107 = vrot.lane.b32.xlu0 %v1074, 127
  %v1108 = vpop.permute.xlu0 %1107
  %1109 = vrot.lane.b32.xlu0 %v1078, 127
  %v1110 = vpop.permute.xlu0 %1109
  %vm1127 = vcmask 400384
  %1128 = vst.msk [vmem:[%s3] sm:$0xff] %vm1127, %v1080
  %1129 = vst.msk [vmem:[%s3 + $0x8] sm:$0xff] %vm1127, %v1082
  %1130 = vst.msk [vmem:[%s3 + $0x10] sm:$0xff] %vm1127, %v1084
  %1131 = vst.msk [vmem:[%s3 + $0x18] sm:$0xff] %vm1127, %v1086
  %1132 = vst.msk [vmem:[%s3 + $0x20] sm:$0xff] %vm1127, %v1088
  %1133 = vst.msk [vmem:[%s3 + $0x28] sm:$0xff] %vm1127, %v1090
  %1134 = vst.msk [vmem:[%s3 + $0x30] sm:$0xff] %vm1127, %v1092
  %1135 = vst.msk [vmem:[%s3 + $0x38] sm:$0xff] %vm1127, %v1094
  %1136 = vst.msk [vmem:[%s3 + $0x40] sm:$0xff] %vm1127, %v1096
  %1137 = vst.msk [vmem:[%s3 + $0x48] sm:$0xff] %vm1127, %v1098
  %1138 = vst.msk [vmem:[%s3 + $0x50] sm:$0xff] %vm1127, %v1100
  %1139 = vst.msk [vmem:[%s3 + $0x58] sm:$0xff] %vm1127, %v1102
  %1140 = vst.msk [vmem:[%s3 + $0x60] sm:$0xff] %vm1127, %v1104
  %1141 = vst.msk [vmem:[%s3 + $0x68] sm:$0xff] %vm1127, %v1106
  %1142 = vst.msk [vmem:[%s3 + $0x70] sm:$0xff] %vm1127, %v1108
  %1143 = vst.msk [vmem:[%s3 + $0x78] sm:$0xff] %vm1127, %v1110
  %s1144 = scalar_lea.vmem %s0, 56
  %v1145 = vld [vmem:[%s1144] sm:$0xff]
  %v1146 = vld [vmem:[%s1144 + $0x8] sm:$0xff]
  %v1147 = vld [vmem:[%s1144 + $0x10] sm:$0xff]
  %v1148 = vld [vmem:[%s1144 + $0x18] sm:$0xff]
  %v1149 = vld [vmem:[%s1144 + $0x20] sm:$0xff]
  %v1150 = vld [vmem:[%s1144 + $0x28] sm:$0xff]
  %v1151 = vld [vmem:[%s1144 + $0x30] sm:$0x3]
  %v1152 = vsel %vm58, %v1145, 0.0
  %1153 = vadd.xlane.f32.xlu0 %v1152
  %v1154 = vpop.xlane.xlu0 %1153
  %v1155 = vsel %vm58, %v1146, 0.0
  %1156 = vadd.xlane.f32.xlu0 %v1155
  %v1157 = vpop.xlane.xlu0 %1156
  %v1158 = vsel %vm58, %v1147, 0.0
  %1159 = vadd.xlane.f32.xlu0 %v1158
  %v1160 = vpop.xlane.xlu0 %1159
  %v1161 = vsel %vm58, %v1148, 0.0
  %1162 = vadd.xlane.f32.xlu0 %v1161
  %v1163 = vpop.xlane.xlu0 %1162
  %v1164 = vsel %vm58, %v1149, 0.0
  %1165 = vadd.xlane.f32.xlu0 %v1164
  %v1166 = vpop.xlane.xlu0 %1165
  %v1167 = vsel %vm58, %v1150, 0.0
  %1168 = vadd.xlane.f32.xlu0 %v1167
  %v1169 = vpop.xlane.xlu0 %1168
  %v1170 = vsel %vm77, %v1151, 0.0
  %1171 = vadd.xlane.f32.xlu0 %v1170
  %v1172 = vpop.xlane.xlu0 %1171
  %v1173 = vmul.f32 %v1154, 0.015625
  %v1174 = vmul.f32 %v1157, 0.015625
  %v1175 = vmul.f32 %v1160, 0.015625
  %v1176 = vmul.f32 %v1163, 0.015625
  %v1177 = vmul.f32 %v1166, 0.015625
  %v1178 = vmul.f32 %v1169, 0.015625
  %v1179 = vmul.f32 %v1172, 0.015625
  %v1180 = vsub.f32 %v1145, %v1173
  %v1181 = vsub.f32 %v1146, %v1174
  %v1182 = vsub.f32 %v1147, %v1175
  %v1183 = vsub.f32 %v1148, %v1176
  %v1184 = vsub.f32 %v1149, %v1177
  %v1185 = vsub.f32 %v1150, %v1178
  %v1186 = vsub.f32 %v1151, %v1179
  %v1187 = vmul.f32 %v1180, %v1180
  %v1188 = vmul.f32 %v1181, %v1181
  %v1189 = vmul.f32 %v1182, %v1182
  %v1190 = vmul.f32 %v1183, %v1183
  %v1191 = vmul.f32 %v1184, %v1184
  %v1192 = vmul.f32 %v1185, %v1185
  %v1193 = vmul.f32 %v1186, %v1186
  %v1194 = vsel %vm58, %v1187, 0.0
  %1195 = vadd.xlane.f32.xlu0 %v1194
  %v1196 = vpop.xlane.xlu0 %1195
  %v1197 = vsel %vm58, %v1188, 0.0
  %1198 = vadd.xlane.f32.xlu0 %v1197
  %v1199 = vpop.xlane.xlu0 %1198
  %v1200 = vsel %vm58, %v1189, 0.0
  %1201 = vadd.xlane.f32.xlu0 %v1200
  %v1202 = vpop.xlane.xlu0 %1201
  %v1203 = vsel %vm58, %v1190, 0.0
  %1204 = vadd.xlane.f32.xlu0 %v1203
  %v1205 = vpop.xlane.xlu0 %1204
  %v1206 = vsel %vm58, %v1191, 0.0
  %1207 = vadd.xlane.f32.xlu0 %v1206
  %v1208 = vpop.xlane.xlu0 %1207
  %v1209 = vsel %vm58, %v1192, 0.0
  %1210 = vadd.xlane.f32.xlu0 %v1209
  %v1211 = vpop.xlane.xlu0 %1210
  %v1212 = vsel %vm77, %v1193, 0.0
  %1213 = vadd.xlane.f32.xlu0 %v1212
  %v1214 = vpop.xlane.xlu0 %1213
  %v1215 = vmul.f32 %v1196, 0.015625
  %v1216 = vmul.f32 %v1199, 0.015625
  %v1217 = vmul.f32 %v1202, 0.015625
  %v1218 = vmul.f32 %v1205, 0.015625
  %v1219 = vmul.f32 %v1208, 0.015625
  %v1220 = vmul.f32 %v1211, 0.015625
  %v1221 = vmul.f32 %v1214, 0.015625
  %v1222 = vadd.f32 %v1215, 1e-05
  %v1223 = vadd.f32 %v1216, 1e-05
  %v1224 = vadd.f32 %v1217, 1e-05
  %v1225 = vadd.f32 %v1218, 1e-05
  %v1226 = vadd.f32 %v1219, 1e-05
  %v1227 = vadd.f32 %v1220, 1e-05
  %v1228 = vadd.f32 %v1221, 1e-05
  %v1229 = vrsqrt.pop %v1222
  %v1230 = vrsqrt.pop %v1223
  %v1231 = vrsqrt.pop %v1224
  %v1232 = vrsqrt.pop %v1225
  %v1233 = vrsqrt.pop %v1226
  %v1234 = vrsqrt.pop %v1227
  %v1235 = vrsqrt.pop %v1228
  %v1236 = vmul.f32 %v1180, %v1229
  %v1237 = vmul.f32 %v1181, %v1230
  %v1238 = vmul.f32 %v1182, %v1231
  %v1239 = vmul.f32 %v1183, %v1232
  %v1240 = vmul.f32 %v1184, %v1233
  %v1241 = vmul.f32 %v1185, %v1234
  %v1242 = vmul.f32 %v1186, %v1235
  %v1243 = vmul.f32 %v1236, %v155
  %v1244 = vmul.f32 %v1237, %v155
  %v1245 = vmul.f32 %v1238, %v155
  %v1246 = vmul.f32 %v1239, %v155
  %v1247 = vmul.f32 %v1240, %v155
  %v1248 = vmul.f32 %v1241, %v155
  %v1249 = vmul.f32 %v1242, %v155
  %v1250 = vadd.f32 %v1243, %v168
  %v1251 = vadd.f32 %v1244, %v168
  %v1252 = vadd.f32 %v1245, %v168
  %v1253 = vadd.f32 %v1246, %v168
  %v1254 = vadd.f32 %v1247, %v168
  %v1255 = vadd.f32 %v1248, %v168
  %v1256 = vadd.f32 %v1249, %v168
  %v1258 = vsel %vm58, %v1250, 0
  %v1261 = vsel %vm58, %v1251, 0
  %v1264 = vsel %vm58, %v1252, 0
  %v1267 = vsel %vm58, %v1253, 0
  %v1270 = vsel %vm58, %v1254, 0
  %v1273 = vsel %vm58, %v1255, 0
  %v1276 = vsel %vm58, %v1256, 0
  %1278 = vmatprep.subr.mxu0 0.0
  %v1279 = vand.u32 %v1258, 4294901760
  %1280 = vmatpush1.xpose.msra.mxu0 %v1279
  %1281 = vmatprep.subr.mxu0 0.0
  %v1282 = vand.u32 %v1261, 4294901760
  %1283 = vmatpush1.xpose.msra.mxu0 %v1282
  %1284 = vmatprep.subr.mxu0 0.0
  %v1285 = vand.u32 %v1264, 4294901760
  %1286 = vmatpush1.xpose.msra.mxu0 %v1285
  %1287 = vmatprep.subr.mxu0 0.0
  %v1288 = vand.u32 %v1267, 4294901760
  %1289 = vmatpush1.xpose.msra.mxu0 %v1288
  %1290 = vmatprep.subr.mxu0 0.0
  %v1291 = vand.u32 %v1270, 4294901760
  %1292 = vmatpush1.xpose.msra.mxu0 %v1291
  %1293 = vmatprep.subr.mxu0 0.0
  %v1294 = vand.u32 %v1273, 4294901760
  %1295 = vmatpush1.xpose.msra.mxu0 %v1294
  %1296 = vmatprep.subr.mxu0 0.0
  %v1297 = vand.u32 %v1276, 4294901760
  %1298 = vmatpush1.xpose.msra.mxu0 %v1297
  %1299 = vmatprep.subr.mxu0 0.0
  %1300 = vmatpush1.xpose.msra.mxu0 0.0
  %1301 = vmatprep.subr.mxu0 0.0
  %1302 = vmatpush1.xpose.msra.mxu0 0.0
  %1303 = vmatprep.subr.mxu0 0.0
  %1304 = vmatpush1.xpose.msra.mxu0 0.0
  %1305 = vmatprep.subr.mxu0 0.0
  %1306 = vmatpush1.xpose.msra.mxu0 0.0
  %1307 = vmatprep.subr.mxu0 0.0
  %1308 = vmatpush1.xpose.msra.mxu0 0.0
  %1309 = vmatprep.subr.mxu0 0.0
  %1310 = vmatpush1.xpose.msra.mxu0 0.0
  %1311 = vmatprep.subr.mxu0 0.0
  %1312 = vmatpush1.xpose.msra.mxu0 0.0
  %1313 = vmatprep.subr.mxu0 0.0
  %1314 = vmatpush1.xpose.msra.mxu0 0.0
  %1315 = vmatprep.subr.mxu0 0.0
  %1316 = vmatpush1.xpose.msra.mxu0 0.0
  %1317 = vmatprep.subr.mxu0 0.0
  %1318 = vmatpush1.xpose.msra.mxu0 0.0
  %1319 = vmatprep.subr.mxu0 0.0
  %1320 = vmatpush1.xpose.msra.mxu0 0.0
  %1321 = vmatprep.subr.mxu0 0.0
  %1322 = vmatpush1.xpose.msra.mxu0 0.0
  %1323 = vmatprep.subr.mxu0 0.0
  %1324 = vmatpush1.xpose.msra.mxu0 0.0
  %1325 = vmatprep.subr.mxu0 0.0
  %1326 = vmatpush1.xpose.msra.mxu0 0.0
  %1327 = vmatprep.subr.mxu0 0.0
  %1328 = vmatpush1.xpose.msra.mxu0 0.0
  %1329 = vmatprep.subr.mxu0 0.0
  %1330 = vmatpush1.xpose.msra.mxu0 0.0
  %1331 = vmatprep.subr.mxu0 0.0
  %1332 = vmatpush1.xpose.msra.mxu0 0.0
  %1333 = vmatprep.subr.mxu0 0.0
  %1334 = vmatpush1.xpose.msra.mxu0 0.0
  %1335 = vmatprep.subr.mxu0 0.0
  %1336 = vmatpush1.xpose.msra.mxu0 0.0
  %1337 = vmatprep.subr.mxu0 0.0
  %1338 = vmatpush1.xpose.msra.mxu0 0.0
  %1339 = vmatprep.subr.mxu0 0.0
  %1340 = vmatpush1.xpose.msra.mxu0 0.0
  %1341 = vmatprep.subr.mxu0 0.0
  %1342 = vmatpush1.xpose.msra.mxu0 0.0
  %1343 = vmatprep.subr.mxu0 0.0
  %1344 = vmatpush1.xpose.msra.mxu0 0.0
  %1345 = vmatprep.subr.mxu0 0.0
  %1346 = vmatpush1.xpose.msra.mxu0 0.0
  %1347 = vmatprep.subr.mxu0 0.0
  %1348 = vmatpush1.xpose.msra.mxu0 0.0
  %1349 = vmatprep.mubr.f32.mxu0 0.0
  %v1350 = vand.u32 %v178, 4294901760
  %v1351 = vsub.f32 %v178, %v1350
  %v1352 = vand.u32 %v1351, 4294901760
  %v1353 = vsub.f32 %v1351, %v1352
  %v1354 = vand.u32 %v1353, 4294901760
  %1355 = vmatmul.mubr.f32.gmra.mrb[0].mxu0 %v1354
  %v1356 = vpop.f32.mrb[0].mxu0
  %v1357 = vadd.f32 0.0, %v1356
  %v1358 = vpop.f32.mrb[0].mxu0
  %1359 = vmatprep.mubr.f32.mxu0 0.0
  %v1360 = vand.u32 %v181, 4294901760
  %v1361 = vsub.f32 %v181, %v1360
  %v1362 = vand.u32 %v1361, 4294901760
  %v1363 = vsub.f32 %v1361, %v1362
  %v1364 = vand.u32 %v1363, 4294901760
  %1365 = vmatmul.mubr.f32.gmra.mrb[0].mxu0 %v1364
  %v1366 = vpop.f32.mrb[0].mxu0
  %v1367 = vadd.f32 0.0, %v1366
  %v1368 = vpop.f32.mrb[0].mxu0
  %1369 = vmatprep.mubr.f32.mxu0 0.0
  %v1370 = vand.u32 %v184, 4294901760
  %v1371 = vsub.f32 %v184, %v1370
  %v1372 = vand.u32 %v1371, 4294901760
  %v1373 = vsub.f32 %v1371, %v1372
  %v1374 = vand.u32 %v1373, 4294901760
  %1375 = vmatmul.mubr.f32.gmra.mrb[0].mxu0 %v1374
  %v1376 = vpop.f32.mrb[0].mxu0
  %v1377 = vadd.f32 0.0, %v1376
  %v1378 = vpop.f32.mrb[0].mxu0
  %1379 = vmatprep.mubr.f32.mxu0 0.0
  %v1380 = vand.u32 %v187, 4294901760
  %v1381 = vsub.f32 %v187, %v1380
  %v1382 = vand.u32 %v1381, 4294901760
  %v1383 = vsub.f32 %v1381, %v1382
  %v1384 = vand.u32 %v1383, 4294901760
  %1385 = vmatmul.mubr.f32.gmra.mrb[0].mxu0 %v1384
  %v1386 = vpop.f32.mrb[0].mxu0
  %v1387 = vadd.f32 0.0, %v1386
  %v1388 = vpop.f32.mrb[0].mxu0
  %1389 = vmatprep.mubr.f32.mxu0 0.0
  %v1390 = vand.u32 %v190, 4294901760
  %v1391 = vsub.f32 %v190, %v1390
  %v1392 = vand.u32 %v1391, 4294901760
  %v1393 = vsub.f32 %v1391, %v1392
  %v1394 = vand.u32 %v1393, 4294901760
  %1395 = vmatmul.mubr.f32.gmra.mrb[0].mxu0 %v1394
  %v1396 = vpop.f32.mrb[0].mxu0
  %v1397 = vadd.f32 0.0, %v1396
  %v1398 = vpop.f32.mrb[0].mxu0
  %1399 = vmatprep.mubr.f32.mxu0 0.0
  %v1400 = vand.u32 %v193, 4294901760
  %v1401 = vsub.f32 %v193, %v1400
  %v1402 = vand.u32 %v1401, 4294901760
  %v1403 = vsub.f32 %v1401, %v1402
  %v1404 = vand.u32 %v1403, 4294901760
  %1405 = vmatmul.mubr.f32.gmra.mrb[0].mxu0 %v1404
  %v1406 = vpop.f32.mrb[0].mxu0
  %v1407 = vadd.f32 0.0, %v1406
  %v1408 = vpop.f32.mrb[0].mxu0
  %1409 = vmatprep.mubr.f32.mxu0 0.0
  %v1410 = vand.u32 %v196, 4294901760
  %v1411 = vsub.f32 %v196, %v1410
  %v1412 = vand.u32 %v1411, 4294901760
  %v1413 = vsub.f32 %v1411, %v1412
  %v1414 = vand.u32 %v1413, 4294901760
  %1415 = vmatmul.mubr.f32.gmra.mrb[0].mxu0 %v1414
  %v1416 = vpop.f32.mrb[0].mxu0
  %v1417 = vadd.f32 0.0, %v1416
  %v1418 = vpop.f32.mrb[0].mxu0
  %1419 = vmatprep.mubr.f32.mxu0 0.0
  %v1420 = vand.u32 %v199, 4294901760
  %v1421 = vsub.f32 %v199, %v1420
  %v1422 = vand.u32 %v1421, 4294901760
  %v1423 = vsub.f32 %v1421, %v1422
  %v1424 = vand.u32 %v1423, 4294901760
  %1425 = vmatmul.mubr.f32.gmra.mrb[0].mxu0 %v1424
  %v1426 = vpop.f32.mrb[0].mxu0
  %v1427 = vadd.f32 0.0, %v1426
  %v1428 = vpop.f32.mrb[0].mxu0
  %1429 = vdwg.mxu0
  %1430 = vmatprep.subr.mxu0 0.0
  %v1431 = vand.u32 %v1258, 4294901760
  %v1432 = vsub.f32 %v1258, %v1431
  %v1433 = vand.u32 %v1432, 4294901760
  %v1434 = vsub.f32 %v1432, %v1433
  %v1435 = vand.u32 %v1434, 4294901760
  %1436 = vmatpush1.xpose.msra.mxu0 %v1435
  %1437 = vmatprep.subr.mxu0 0.0
  %v1438 = vand.u32 %v1261, 4294901760
  %v1439 = vsub.f32 %v1261, %v1438
  %v1440 = vand.u32 %v1439, 4294901760
  %v1441 = vsub.f32 %v1439, %v1440
  %v1442 = vand.u32 %v1441, 4294901760
  %1443 = vmatpush1.xpose.msra.mxu0 %v1442
  %1444 = vmatprep.subr.mxu0 0.0
  %v1445 = vand.u32 %v1264, 4294901760
  %v1446 = vsub.f32 %v1264, %v1445
  %v1447 = vand.u32 %v1446, 4294901760
  %v1448 = vsub.f32 %v1446, %v1447
  %v1449 = vand.u32 %v1448, 4294901760
  %1450 = vmatpush1.xpose.msra.mxu0 %v1449
  %1451 = vmatprep.subr.mxu0 0.0
  %v1452 = vand.u32 %v1267, 4294901760
  %v1453 = vsub.f32 %v1267, %v1452
  %v1454 = vand.u32 %v1453, 4294901760
  %v1455 = vsub.f32 %v1453, %v1454
  %v1456 = vand.u32 %v1455, 4294901760
  %1457 = vmatpush1.xpose.msra.mxu0 %v1456
  %1458 = vmatprep.subr.mxu0 0.0
  %v1459 = vand.u32 %v1270, 4294901760
  %v1460 = vsub.f32 %v1270, %v1459
  %v1461 = vand.u32 %v1460, 4294901760
  %v1462 = vsub.f32 %v1460, %v1461
  %v1463 = vand.u32 %v1462, 4294901760
  %1464 = vmatpush1.xpose.msra.mxu0 %v1463
  %1465 = vmatprep.subr.mxu0 0.0
  %v1466 = vand.u32 %v1273, 4294901760
  %v1467 = vsub.f32 %v1273, %v1466
  %v1468 = vand.u32 %v1467, 4294901760
  %v1469 = vsub.f32 %v1467, %v1468
  %v1470 = vand.u32 %v1469, 4294901760
  %1471 = vmatpush1.xpose.msra.mxu0 %v1470
  %1472 = vmatprep.subr.mxu0 0.0
  %v1473 = vand.u32 %v1276, 4294901760
  %v1474 = vsub.f32 %v1276, %v1473
  %v1475 = vand.u32 %v1474, 4294901760
  %v1476 = vsub.f32 %v1474, %v1475
  %v1477 = vand.u32 %v1476, 4294901760
  %1478 = vmatpush1.xpose.msra.mxu0 %v1477
  %1479 = vmatprep.subr.mxu0 0.0
  %1480 = vmatpush1.xpose.msra.mxu0 0.0
  %1481 = vmatprep.subr.mxu0 0.0
  %1482 = vmatpush1.xpose.msra.mxu0 0.0
  %1483 = vmatprep.subr.mxu0 0.0
  %1484 = vmatpush1.xpose.msra.mxu0 0.0
  %1485 = vmatprep.subr.mxu0 0.0
  %1486 = vmatpush1.xpose.msra.mxu0 0.0
  %1487 = vmatprep.subr.mxu0 0.0
  %1488 = vmatpush1.xpose.msra.mxu0 0.0
  %1489 = vmatprep.subr.mxu0 0.0
  %1490 = vmatpush1.xpose.msra.mxu0 0.0
  %1491 = vmatprep.subr.mxu0 0.0
  %1492 = vmatpush1.xpose.msra.mxu0 0.0
  %1493 = vmatprep.subr.mxu0 0.0
  %1494 = vmatpush1.xpose.msra.mxu0 0.0
  %1495 = vmatprep.subr.mxu0 0.0
  %1496 = vmatpush1.xpose.msra.mxu0 0.0
  %1497 = vmatprep.subr.mxu0 0.0
  %1498 = vmatpush1.xpose.msra.mxu0 0.0
  %1499 = vmatprep.subr.mxu0 0.0
  %1500 = vmatpush1.xpose.msra.mxu0 0.0
  %1501 = vmatprep.subr.mxu0 0.0
  %1502 = vmatpush1.xpose.msra.mxu0 0.0
  %1503 = vmatprep.subr.mxu0 0.0
  %1504 = vmatpush1.xpose.msra.mxu0 0.0
  %1505 = vmatprep.subr.mxu0 0.0
  %1506 = vmatpush1.xpose.msra.mxu0 0.0
  %1507 = vmatprep.subr.mxu0 0.0
  %1508 = vmatpush1.xpose.msra.mxu0 0.0
  %1509 = vmatprep.subr.mxu0 0.0
  %1510 = vmatpush1.xpose.msra.mxu0 0.0
  %1511 = vmatprep.subr.mxu0 0.0
  %1512 = vmatpush1.xpose.msra.mxu0 0.0
  %1513 = vmatprep.subr.mxu0 0.0
  %1514 = vmatpush1.xpose.msra.mxu0 0.0
  %1515 = vmatprep.subr.mxu0 0.0
  %1516 = vmatpush1.xpose.msra.mxu0 0.0
  %1517 = vmatprep.subr.mxu0 0.0
  %1518 = vmatpush1.xpose.msra.mxu0 0.0
  %1519 = vmatprep.subr.mxu0 0.0
  %1520 = vmatpush1.xpose.msra.mxu0 0.0
  %1521 = vmatprep.subr.mxu0 0.0
  %1522 = vmatpush1.xpose.msra.mxu0 0.0
  %1523 = vmatprep.subr.mxu0 0.0
  %1524 = vmatpush1.xpose.msra.mxu0 0.0
  %1525 = vmatprep.subr.mxu0 0.0
  %1526 = vmatpush1.xpose.msra.mxu0 0.0
  %1527 = vmatprep.subr.mxu0 0.0
  %1528 = vmatpush1.xpose.msra.mxu0 0.0
  %1529 = vmatprep.mubr.f32.mxu0 0.0
  %v1530 = vand.u32 %v178, 4294901760
  %1531 = vmatmul.mubr.f32.gmra.mrb[0].mxu0 %v1530
  %v1532 = vpop.f32.mrb[0].mxu0
  %v1533 = vadd.f32 %v1357, %v1532
  %v1534 = vpop.f32.mrb[0].mxu0
  %1535 = vmatprep.mubr.f32.mxu0 0.0
  %v1536 = vand.u32 %v181, 4294901760
  %1537 = vmatmul.mubr.f32.gmra.mrb[0].mxu0 %v1536
  %v1538 = vpop.f32.mrb[0].mxu0
  %v1539 = vadd.f32 %v1367, %v1538
  %v1540 = vpop.f32.mrb[0].mxu0
  %1541 = vmatprep.mubr.f32.mxu0 0.0
  %v1542 = vand.u32 %v184, 4294901760
  %1543 = vmatmul.mubr.f32.gmra.mrb[0].mxu0 %v1542
  %v1544 = vpop.f32.mrb[0].mxu0
  %v1545 = vadd.f32 %v1377, %v1544
  %v1546 = vpop.f32.mrb[0].mxu0
  %1547 = vmatprep.mubr.f32.mxu0 0.0
  %v1548 = vand.u32 %v187, 4294901760
  %1549 = vmatmul.mubr.f32.gmra.mrb[0].mxu0 %v1548
  %v1550 = vpop.f32.mrb[0].mxu0
  %v1551 = vadd.f32 %v1387, %v1550
  %v1552 = vpop.f32.mrb[0].mxu0
  %1553 = vmatprep.mubr.f32.mxu0 0.0
  %v1554 = vand.u32 %v190, 4294901760
  %1555 = vmatmul.mubr.f32.gmra.mrb[0].mxu0 %v1554
  %v1556 = vpop.f32.mrb[0].mxu0
  %v1557 = vadd.f32 %v1397, %v1556
  %v1558 = vpop.f32.mrb[0].mxu0
  %1559 = vmatprep.mubr.f32.mxu0 0.0
  %v1560 = vand.u32 %v193, 4294901760
  %1561 = vmatmul.mubr.f32.gmra.mrb[0].mxu0 %v1560
  %v1562 = vpop.f32.mrb[0].mxu0
  %v1563 = vadd.f32 %v1407, %v1562
  %v1564 = vpop.f32.mrb[0].mxu0
  %1565 = vmatprep.mubr.f32.mxu0 0.0
  %v1566 = vand.u32 %v196, 4294901760
  %1567 = vmatmul.mubr.f32.gmra.mrb[0].mxu0 %v1566
  %v1568 = vpop.f32.mrb[0].mxu0
  %v1569 = vadd.f32 %v1417, %v1568
  %v1570 = vpop.f32.mrb[0].mxu0
  %1571 = vmatprep.mubr.f32.mxu0 0.0
  %v1572 = vand.u32 %v199, 4294901760
  %1573 = vmatmul.mubr.f32.gmra.mrb[0].mxu0 %v1572
  %v1574 = vpop.f32.mrb[0].mxu0
  %v1575 = vadd.f32 %v1427, %v1574
  %v1576 = vpop.f32.mrb[0].mxu0
  %1577 = vdwg.mxu0
  %1578 = vmatprep.subr.mxu0 0.0
  %v1579 = vand.u32 %v1258, 4294901760
  %v1580 = vsub.f32 %v1258, %v1579
  %1581 = vmatpush1.xpose.msra.mxu0 %v1580
  %1582 = vmatprep.subr.mxu0 0.0
  %v1583 = vand.u32 %v1261, 4294901760
  %v1584 = vsub.f32 %v1261, %v1583
  %1585 = vmatpush1.xpose.msra.mxu0 %v1584
  %1586 = vmatprep.subr.mxu0 0.0
  %v1587 = vand.u32 %v1264, 4294901760
  %v1588 = vsub.f32 %v1264, %v1587
  %1589 = vmatpush1.xpose.msra.mxu0 %v1588
  %1590 = vmatprep.subr.mxu0 0.0
  %v1591 = vand.u32 %v1267, 4294901760
  %v1592 = vsub.f32 %v1267, %v1591
  %1593 = vmatpush1.xpose.msra.mxu0 %v1592
  %1594 = vmatprep.subr.mxu0 0.0
  %v1595 = vand.u32 %v1270, 4294901760
  %v1596 = vsub.f32 %v1270, %v1595
  %1597 = vmatpush1.xpose.msra.mxu0 %v1596
  %1598 = vmatprep.subr.mxu0 0.0
  %v1599 = vand.u32 %v1273, 4294901760
  %v1600 = vsub.f32 %v1273, %v1599
  %1601 = vmatpush1.xpose.msra.mxu0 %v1600
  %1602 = vmatprep.subr.mxu0 0.0
  %v1603 = vand.u32 %v1276, 4294901760
  %v1604 = vsub.f32 %v1276, %v1603
  %1605 = vmatpush1.xpose.msra.mxu0 %v1604
  %1606 = vmatprep.subr.mxu0 0.0
  %1607 = vmatpush1.xpose.msra.mxu0 0.0
  %1608 = vmatprep.subr.mxu0 0.0
  %1609 = vmatpush1.xpose.msra.mxu0 0.0
  %1610 = vmatprep.subr.mxu0 0.0
  %1611 = vmatpush1.xpose.msra.mxu0 0.0
  %1612 = vmatprep.subr.mxu0 0.0
  %1613 = vmatpush1.xpose.msra.mxu0 0.0
  %1614 = vmatprep.subr.mxu0 0.0
  %1615 = vmatpush1.xpose.msra.mxu0 0.0
  %1616 = vmatprep.subr.mxu0 0.0
  %1617 = vmatpush1.xpose.msra.mxu0 0.0
  %1618 = vmatprep.subr.mxu0 0.0
  %1619 = vmatpush1.xpose.msra.mxu0 0.0
  %1620 = vmatprep.subr.mxu0 0.0
  %1621 = vmatpush1.xpose.msra.mxu0 0.0
  %1622 = vmatprep.subr.mxu0 0.0
  %1623 = vmatpush1.xpose.msra.mxu0 0.0
  %1624 = vmatprep.subr.mxu0 0.0
  %1625 = vmatpush1.xpose.msra.mxu0 0.0
  %1626 = vmatprep.subr.mxu0 0.0
  %1627 = vmatpush1.xpose.msra.mxu0 0.0
  %1628 = vmatprep.subr.mxu0 0.0
  %1629 = vmatpush1.xpose.msra.mxu0 0.0
  %1630 = vmatprep.subr.mxu0 0.0
  %1631 = vmatpush1.xpose.msra.mxu0 0.0
  %1632 = vmatprep.subr.mxu0 0.0
  %1633 = vmatpush1.xpose.msra.mxu0 0.0
  %1634 = vmatprep.subr.mxu0 0.0
  %1635 = vmatpush1.xpose.msra.mxu0 0.0
  %1636 = vmatprep.subr.mxu0 0.0
  %1637 = vmatpush1.xpose.msra.mxu0 0.0
  %1638 = vmatprep.subr.mxu0 0.0
  %1639 = vmatpush1.xpose.msra.mxu0 0.0
  %1640 = vmatprep.subr.mxu0 0.0
  %1641 = vmatpush1.xpose.msra.mxu0 0.0
  %1642 = vmatprep.subr.mxu0 0.0
  %1643 = vmatpush1.xpose.msra.mxu0 0.0
  %1644 = vmatprep.subr.mxu0 0.0
  %1645 = vmatpush1.xpose.msra.mxu0 0.0
  %1646 = vmatprep.subr.mxu0 0.0
  %1647 = vmatpush1.xpose.msra.mxu0 0.0
  %1648 = vmatprep.subr.mxu0 0.0
  %1649 = vmatpush1.xpose.msra.mxu0 0.0
  %1650 = vmatprep.subr.mxu0 0.0
  %1651 = vmatpush1.xpose.msra.mxu0 0.0
  %1652 = vmatprep.subr.mxu0 0.0
  %1653 = vmatpush1.xpose.msra.mxu0 0.0
  %1654 = vmatprep.subr.mxu0 0.0
  %1655 = vmatpush1.xpose.msra.mxu0 0.0
  %1656 = vmatprep.mubr.f32.mxu0 0.0
  %v1657 = vand.u32 %v178, 4294901760
  %v1658 = vsub.f32 %v178, %v1657
  %1659 = vmatmul.mubr.f32.gmra.mrb[0].mxu0 %v1658
  %v1660 = vpop.f32.mrb[0].mxu0
  %v1661 = vadd.f32 %v1533, %v1660
  %v1662 = vpop.f32.mrb[0].mxu0
  %1663 = vmatprep.mubr.f32.mxu0 0.0
  %v1664 = vand.u32 %v181, 4294901760
  %v1665 = vsub.f32 %v181, %v1664
  %1666 = vmatmul.mubr.f32.gmra.mrb[0].mxu0 %v1665
  %v1667 = vpop.f32.mrb[0].mxu0
  %v1668 = vadd.f32 %v1539, %v1667
  %v1669 = vpop.f32.mrb[0].mxu0
  %1670 = vmatprep.mubr.f32.mxu0 0.0
  %v1671 = vand.u32 %v184, 4294901760
  %v1672 = vsub.f32 %v184, %v1671
  %1673 = vmatmul.mubr.f32.gmra.mrb[0].mxu0 %v1672
  %v1674 = vpop.f32.mrb[0].mxu0
  %v1675 = vadd.f32 %v1545, %v1674
  %v1676 = vpop.f32.mrb[0].mxu0
  %1677 = vmatprep.mubr.f32.mxu0 0.0
  %v1678 = vand.u32 %v187, 4294901760
  %v1679 = vsub.f32 %v187, %v1678
  %1680 = vmatmul.mubr.f32.gmra.mrb[0].mxu0 %v1679
  %v1681 = vpop.f32.mrb[0].mxu0
  %v1682 = vadd.f32 %v1551, %v1681
  %v1683 = vpop.f32.mrb[0].mxu0
  %1684 = vmatprep.mubr.f32.mxu0 0.0
  %v1685 = vand.u32 %v190, 4294901760
  %v1686 = vsub.f32 %v190, %v1685
  %1687 = vmatmul.mubr.f32.gmra.mrb[0].mxu0 %v1686
  %v1688 = vpop.f32.mrb[0].mxu0
  %v1689 = vadd.f32 %v1557, %v1688
  %v1690 = vpop.f32.mrb[0].mxu0
  %1691 = vmatprep.mubr.f32.mxu0 0.0
  %v1692 = vand.u32 %v193, 4294901760
  %v1693 = vsub.f32 %v193, %v1692
  %1694 = vmatmul.mubr.f32.gmra.mrb[0].mxu0 %v1693
  %v1695 = vpop.f32.mrb[0].mxu0
  %v1696 = vadd.f32 %v1563, %v1695
  %v1697 = vpop.f32.mrb[0].mxu0
  %1698 = vmatprep.mubr.f32.mxu0 0.0
  %v1699 = vand.u32 %v196, 4294901760
  %v1700 = vsub.f32 %v196, %v1699
  %1701 = vmatmul.mubr.f32.gmra.mrb[0].mxu0 %v1700
  %v1702 = vpop.f32.mrb[0].mxu0
  %v1703 = vadd.f32 %v1569, %v1702
  %v1704 = vpop.f32.mrb[0].mxu0
  %1705 = vmatprep.mubr.f32.mxu0 0.0
  %v1706 = vand.u32 %v199, 4294901760
  %v1707 = vsub.f32 %v199, %v1706
  %1708 = vmatmul.mubr.f32.gmra.mrb[0].mxu0 %v1707
  %v1709 = vpop.f32.mrb[0].mxu0
  %v1710 = vadd.f32 %v1575, %v1709
  %v1711 = vpop.f32.mrb[0].mxu0
  %1712 = vdwg.mxu0
  %1713 = vmatprep.subr.mxu0 0.0
  %v1714 = vand.u32 %v1258, 4294901760
  %1715 = vmatpush1.xpose.msra.mxu0 %v1714
  %1716 = vmatprep.subr.mxu0 0.0
  %v1717 = vand.u32 %v1261, 4294901760
  %1718 = vmatpush1.xpose.msra.mxu0 %v1717
  %1719 = vmatprep.subr.mxu0 0.0
  %v1720 = vand.u32 %v1264, 4294901760
  %1721 = vmatpush1.xpose.msra.mxu0 %v1720
  %1722 = vmatprep.subr.mxu0 0.0
  %v1723 = vand.u32 %v1267, 4294901760
  %1724 = vmatpush1.xpose.msra.mxu0 %v1723
  %1725 = vmatprep.subr.mxu0 0.0
  %v1726 = vand.u32 %v1270, 4294901760
  %1727 = vmatpush1.xpose.msra.mxu0 %v1726
  %1728 = vmatprep.subr.mxu0 0.0
  %v1729 = vand.u32 %v1273, 4294901760
  %1730 = vmatpush1.xpose.msra.mxu0 %v1729
  %1731 = vmatprep.subr.mxu0 0.0
  %v1732 = vand.u32 %v1276, 4294901760
  %1733 = vmatpush1.xpose.msra.mxu0 %v1732
  %1734 = vmatprep.subr.mxu0 0.0
  %1735 = vmatpush1.xpose.msra.mxu0 0.0
  %1736 = vmatprep.subr.mxu0 0.0
  %1737 = vmatpush1.xpose.msra.mxu0 0.0
  %1738 = vmatprep.subr.mxu0 0.0
  %1739 = vmatpush1.xpose.msra.mxu0 0.0
  %1740 = vmatprep.subr.mxu0 0.0
  %1741 = vmatpush1.xpose.msra.mxu0 0.0
  %1742 = vmatprep.subr.mxu0 0.0
  %1743 = vmatpush1.xpose.msra.mxu0 0.0
  %1744 = vmatprep.subr.mxu0 0.0
  %1745 = vmatpush1.xpose.msra.mxu0 0.0
  %1746 = vmatprep.subr.mxu0 0.0
  %1747 = vmatpush1.xpose.msra.mxu0 0.0
  %1748 = vmatprep.subr.mxu0 0.0
  %1749 = vmatpush1.xpose.msra.mxu0 0.0
  %1750 = vmatprep.subr.mxu0 0.0
  %1751 = vmatpush1.xpose.msra.mxu0 0.0
  %1752 = vmatprep.subr.mxu0 0.0
  %1753 = vmatpush1.xpose.msra.mxu0 0.0
  %1754 = vmatprep.subr.mxu0 0.0
  %1755 = vmatpush1.xpose.msra.mxu0 0.0
  %1756 = vmatprep.subr.mxu0 0.0
  %1757 = vmatpush1.xpose.msra.mxu0 0.0
  %1758 = vmatprep.subr.mxu0 0.0
  %1759 = vmatpush1.xpose.msra.mxu0 0.0
  %1760 = vmatprep.subr.mxu0 0.0
  %1761 = vmatpush1.xpose.msra.mxu0 0.0
  %1762 = vmatprep.subr.mxu0 0.0
  %1763 = vmatpush1.xpose.msra.mxu0 0.0
  %1764 = vmatprep.subr.mxu0 0.0
  %1765 = vmatpush1.xpose.msra.mxu0 0.0
  %1766 = vmatprep.subr.mxu0 0.0
  %1767 = vmatpush1.xpose.msra.mxu0 0.0
  %1768 = vmatprep.subr.mxu0 0.0
  %1769 = vmatpush1.xpose.msra.mxu0 0.0
  %1770 = vmatprep.subr.mxu0 0.0
  %1771 = vmatpush1.xpose.msra.mxu0 0.0
  %1772 = vmatprep.subr.mxu0 0.0
  %1773 = vmatpush1.xpose.msra.mxu0 0.0
  %1774 = vmatprep.subr.mxu0 0.0
  %1775 = vmatpush1.xpose.msra.mxu0 0.0
  %1776 = vmatprep.subr.mxu0 0.0
  %1777 = vmatpush1.xpose.msra.mxu0 0.0
  %1778 = vmatprep.subr.mxu0 0.0
  %1779 = vmatpush1.xpose.msra.mxu0 0.0
  %1780 = vmatprep.subr.mxu0 0.0
  %1781 = vmatpush1.xpose.msra.mxu0 0.0
  %1782 = vmatprep.subr.mxu0 0.0
  %1783 = vmatpush1.xpose.msra.mxu0 0.0
  %1784 = vmatprep.mubr.f32.mxu0 0.0
  %v1785 = vand.u32 %v178, 4294901760
  %v1786 = vsub.f32 %v178, %v1785
  %v1787 = vand.u32 %v1786, 4294901760
  %1788 = vmatmul.mubr.f32.gmra.mrb[0].mxu0 %v1787
  %v1789 = vpop.f32.mrb[0].mxu0
  %v1790 = vadd.f32 %v1661, %v1789
  %v1791 = vpop.f32.mrb[0].mxu0
  %1792 = vmatprep.mubr.f32.mxu0 0.0
  %v1793 = vand.u32 %v181, 4294901760
  %v1794 = vsub.f32 %v181, %v1793
  %v1795 = vand.u32 %v1794, 4294901760
  %1796 = vmatmul.mubr.f32.gmra.mrb[0].mxu0 %v1795
  %v1797 = vpop.f32.mrb[0].mxu0
  %v1798 = vadd.f32 %v1668, %v1797
  %v1799 = vpop.f32.mrb[0].mxu0
  %1800 = vmatprep.mubr.f32.mxu0 0.0
  %v1801 = vand.u32 %v184, 4294901760
  %v1802 = vsub.f32 %v184, %v1801
  %v1803 = vand.u32 %v1802, 4294901760
  %1804 = vmatmul.mubr.f32.gmra.mrb[0].mxu0 %v1803
  %v1805 = vpop.f32.mrb[0].mxu0
  %v1806 = vadd.f32 %v1675, %v1805
  %v1807 = vpop.f32.mrb[0].mxu0
  %1808 = vmatprep.mubr.f32.mxu0 0.0
  %v1809 = vand.u32 %v187, 4294901760
  %v1810 = vsub.f32 %v187, %v1809
  %v1811 = vand.u32 %v1810, 4294901760
  %1812 = vmatmul.mubr.f32.gmra.mrb[0].mxu0 %v1811
  %v1813 = vpop.f32.mrb[0].mxu0
  %v1814 = vadd.f32 %v1682, %v1813
  %v1815 = vpop.f32.mrb[0].mxu0
  %1816 = vmatprep.mubr.f32.mxu0 0.0
  %v1817 = vand.u32 %v190, 4294901760
  %v1818 = vsub.f32 %v190, %v1817
  %v1819 = vand.u32 %v1818, 4294901760
  %1820 = vmatmul.mubr.f32.gmra.mrb[0].mxu0 %v1819
  %v1821 = vpop.f32.mrb[0].mxu0
  %v1822 = vadd.f32 %v1689, %v1821
  %v1823 = vpop.f32.mrb[0].mxu0
  %1824 = vmatprep.mubr.f32.mxu0 0.0
  %v1825 = vand.u32 %v193, 4294901760
  %v1826 = vsub.f32 %v193, %v1825
  %v1827 = vand.u32 %v1826, 4294901760
  %1828 = vmatmul.mubr.f32.gmra.mrb[0].mxu0 %v1827
  %v1829 = vpop.f32.mrb[0].mxu0
  %v1830 = vadd.f32 %v1696, %v1829
  %v1831 = vpop.f32.mrb[0].mxu0
  %1832 = vmatprep.mubr.f32.mxu0 0.0
  %v1833 = vand.u32 %v196, 4294901760
  %v1834 = vsub.f32 %v196, %v1833
  %v1835 = vand.u32 %v1834, 4294901760
  %1836 = vmatmul.mubr.f32.gmra.mrb[0].mxu0 %v1835
  %v1837 = vpop.f32.mrb[0].mxu0
  %v1838 = vadd.f32 %v1703, %v1837
  %v1839 = vpop.f32.mrb[0].mxu0
  %1840 = vmatprep.mubr.f32.mxu0 0.0
  %v1841 = vand.u32 %v199, 4294901760
  %v1842 = vsub.f32 %v199, %v1841
  %v1843 = vand.u32 %v1842, 4294901760
  %1844 = vmatmul.mubr.f32.gmra.mrb[0].mxu0 %v1843
  %v1845 = vpop.f32.mrb[0].mxu0
  %v1846 = vadd.f32 %v1710, %v1845
  %v1847 = vpop.f32.mrb[0].mxu0
  %1848 = vdwg.mxu0
  %1849 = vmatprep.subr.mxu0 0.0
  %v1850 = vand.u32 %v1258, 4294901760
  %v1851 = vsub.f32 %v1258, %v1850
  %v1852 = vand.u32 %v1851, 4294901760
  %1853 = vmatpush1.xpose.msra.mxu0 %v1852
  %1854 = vmatprep.subr.mxu0 0.0
  %v1855 = vand.u32 %v1261, 4294901760
  %v1856 = vsub.f32 %v1261, %v1855
  %v1857 = vand.u32 %v1856, 4294901760
  %1858 = vmatpush1.xpose.msra.mxu0 %v1857
  %1859 = vmatprep.subr.mxu0 0.0
  %v1860 = vand.u32 %v1264, 4294901760
  %v1861 = vsub.f32 %v1264, %v1860
  %v1862 = vand.u32 %v1861, 4294901760
  %1863 = vmatpush1.xpose.msra.mxu0 %v1862
  %1864 = vmatprep.subr.mxu0 0.0
  %v1865 = vand.u32 %v1267, 4294901760
  %v1866 = vsub.f32 %v1267, %v1865
  %v1867 = vand.u32 %v1866, 4294901760
  %1868 = vmatpush1.xpose.msra.mxu0 %v1867
  %1869 = vmatprep.subr.mxu0 0.0
  %v1870 = vand.u32 %v1270, 4294901760
  %v1871 = vsub.f32 %v1270, %v1870
  %v1872 = vand.u32 %v1871, 4294901760
  %1873 = vmatpush1.xpose.msra.mxu0 %v1872
  %1874 = vmatprep.subr.mxu0 0.0
  %v1875 = vand.u32 %v1273, 4294901760
  %v1876 = vsub.f32 %v1273, %v1875
  %v1877 = vand.u32 %v1876, 4294901760
  %1878 = vmatpush1.xpose.msra.mxu0 %v1877
  %1879 = vmatprep.subr.mxu0 0.0
  %v1880 = vand.u32 %v1276, 4294901760
  %v1881 = vsub.f32 %v1276, %v1880
  %v1882 = vand.u32 %v1881, 4294901760
  %1883 = vmatpush1.xpose.msra.mxu0 %v1882
  %1884 = vmatprep.subr.mxu0 0.0
  %1885 = vmatpush1.xpose.msra.mxu0 0.0
  %1886 = vmatprep.subr.mxu0 0.0
  %1887 = vmatpush1.xpose.msra.mxu0 0.0
  %1888 = vmatprep.subr.mxu0 0.0
  %1889 = vmatpush1.xpose.msra.mxu0 0.0
  %1890 = vmatprep.subr.mxu0 0.0
  %1891 = vmatpush1.xpose.msra.mxu0 0.0
  %1892 = vmatprep.subr.mxu0 0.0
  %1893 = vmatpush1.xpose.msra.mxu0 0.0
  %1894 = vmatprep.subr.mxu0 0.0
  %1895 = vmatpush1.xpose.msra.mxu0 0.0
  %1896 = vmatprep.subr.mxu0 0.0
  %1897 = vmatpush1.xpose.msra.mxu0 0.0
  %1898 = vmatprep.subr.mxu0 0.0
  %1899 = vmatpush1.xpose.msra.mxu0 0.0
  %1900 = vmatprep.subr.mxu0 0.0
  %1901 = vmatpush1.xpose.msra.mxu0 0.0
  %1902 = vmatprep.subr.mxu0 0.0
  %1903 = vmatpush1.xpose.msra.mxu0 0.0
  %1904 = vmatprep.subr.mxu0 0.0
  %1905 = vmatpush1.xpose.msra.mxu0 0.0
  %1906 = vmatprep.subr.mxu0 0.0
  %1907 = vmatpush1.xpose.msra.mxu0 0.0
  %1908 = vmatprep.subr.mxu0 0.0
  %1909 = vmatpush1.xpose.msra.mxu0 0.0
  %1910 = vmatprep.subr.mxu0 0.0
  %1911 = vmatpush1.xpose.msra.mxu0 0.0
  %1912 = vmatprep.subr.mxu0 0.0
  %1913 = vmatpush1.xpose.msra.mxu0 0.0
  %1914 = vmatprep.subr.mxu0 0.0
  %1915 = vmatpush1.xpose.msra.mxu0 0.0
  %1916 = vmatprep.subr.mxu0 0.0
  %1917 = vmatpush1.xpose.msra.mxu0 0.0
  %1918 = vmatprep.subr.mxu0 0.0
  %1919 = vmatpush1.xpose.msra.mxu0 0.0
  %1920 = vmatprep.subr.mxu0 0.0
  %1921 = vmatpush1.xpose.msra.mxu0 0.0
  %1922 = vmatprep.subr.mxu0 0.0
  %1923 = vmatpush1.xpose.msra.mxu0 0.0
  %1924 = vmatprep.subr.mxu0 0.0
  %1925 = vmatpush1.xpose.msra.mxu0 0.0
  %1926 = vmatprep.subr.mxu0 0.0
  %1927 = vmatpush1.xpose.msra.mxu0 0.0
  %1928 = vmatprep.subr.mxu0 0.0
  %1929 = vmatpush1.xpose.msra.mxu0 0.0
  %1930 = vmatprep.subr.mxu0 0.0
  %1931 = vmatpush1.xpose.msra.mxu0 0.0
  %1932 = vmatprep.subr.mxu0 0.0
  %1933 = vmatpush1.xpose.msra.mxu0 0.0
  %1934 = vmatprep.mubr.f32.mxu0 0.0
  %v1935 = vand.u32 %v178, 4294901760
  %1936 = vmatmul.mubr.f32.gmra.mrb[0].mxu0 %v1935
  %v1937 = vpop.f32.mrb[0].mxu0
  %v1938 = vadd.f32 %v1790, %v1937
  %v1939 = vpop.f32.mrb[0].mxu0
  %1940 = vmatprep.mubr.f32.mxu0 0.0
  %v1941 = vand.u32 %v181, 4294901760
  %1942 = vmatmul.mubr.f32.gmra.mrb[0].mxu0 %v1941
  %v1943 = vpop.f32.mrb[0].mxu0
  %v1944 = vadd.f32 %v1798, %v1943
  %v1945 = vpop.f32.mrb[0].mxu0
  %1946 = vmatprep.mubr.f32.mxu0 0.0
  %v1947 = vand.u32 %v184, 4294901760
  %1948 = vmatmul.mubr.f32.gmra.mrb[0].mxu0 %v1947
  %v1949 = vpop.f32.mrb[0].mxu0
  %v1950 = vadd.f32 %v1806, %v1949
  %v1951 = vpop.f32.mrb[0].mxu0
  %1952 = vmatprep.mubr.f32.mxu0 0.0
  %v1953 = vand.u32 %v187, 4294901760
  %1954 = vmatmul.mubr.f32.gmra.mrb[0].mxu0 %v1953
  %v1955 = vpop.f32.mrb[0].mxu0
  %v1956 = vadd.f32 %v1814, %v1955
  %v1957 = vpop.f32.mrb[0].mxu0
  %1958 = vmatprep.mubr.f32.mxu0 0.0
  %v1959 = vand.u32 %v190, 4294901760
  %1960 = vmatmul.mubr.f32.gmra.mrb[0].mxu0 %v1959
  %v1961 = vpop.f32.mrb[0].mxu0
  %v1962 = vadd.f32 %v1822, %v1961
  %v1963 = vpop.f32.mrb[0].mxu0
  %1964 = vmatprep.mubr.f32.mxu0 0.0
  %v1965 = vand.u32 %v193, 4294901760
  %1966 = vmatmul.mubr.f32.gmra.mrb[0].mxu0 %v1965
  %v1967 = vpop.f32.mrb[0].mxu0
  %v1968 = vadd.f32 %v1830, %v1967
  %v1969 = vpop.f32.mrb[0].mxu0
  %1970 = vmatprep.mubr.f32.mxu0 0.0
  %v1971 = vand.u32 %v196, 4294901760
  %1972 = vmatmul.mubr.f32.gmra.mrb[0].mxu0 %v1971
  %v1973 = vpop.f32.mrb[0].mxu0
  %v1974 = vadd.f32 %v1838, %v1973
  %v1975 = vpop.f32.mrb[0].mxu0
  %1976 = vmatprep.mubr.f32.mxu0 0.0
  %v1977 = vand.u32 %v199, 4294901760
  %1978 = vmatmul.mubr.f32.gmra.mrb[0].mxu0 %v1977
  %v1979 = vpop.f32.mrb[0].mxu0
  %v1980 = vadd.f32 %v1846, %v1979
  %v1981 = vpop.f32.mrb[0].mxu0
  %1982 = vdwg.mxu0
  %1983 = vmatprep.subr.mxu0 0.0
  %v1984 = vand.u32 %v1258, 4294901760
  %1985 = vmatpush1.xpose.msra.mxu0 %v1984
  %1986 = vmatprep.subr.mxu0 0.0
  %v1987 = vand.u32 %v1261, 4294901760
  %1988 = vmatpush1.xpose.msra.mxu0 %v1987
  %1989 = vmatprep.subr.mxu0 0.0
  %v1990 = vand.u32 %v1264, 4294901760
  %1991 = vmatpush1.xpose.msra.mxu0 %v1990
  %1992 = vmatprep.subr.mxu0 0.0
  %v1993 = vand.u32 %v1267, 4294901760
  %1994 = vmatpush1.xpose.msra.mxu0 %v1993
  %1995 = vmatprep.subr.mxu0 0.0
  %v1996 = vand.u32 %v1270, 4294901760
  %1997 = vmatpush1.xpose.msra.mxu0 %v1996
  %1998 = vmatprep.subr.mxu0 0.0
  %v1999 = vand.u32 %v1273, 4294901760
  %2000 = vmatpush1.xpose.msra.mxu0 %v1999
  %2001 = vmatprep.subr.mxu0 0.0
  %v2002 = vand.u32 %v1276, 4294901760
  %2003 = vmatpush1.xpose.msra.mxu0 %v2002
  %2004 = vmatprep.subr.mxu0 0.0
  %2005 = vmatpush1.xpose.msra.mxu0 0.0
  %2006 = vmatprep.subr.mxu0 0.0
  %2007 = vmatpush1.xpose.msra.mxu0 0.0
  %2008 = vmatprep.subr.mxu0 0.0
  %2009 = vmatpush1.xpose.msra.mxu0 0.0
  %2010 = vmatprep.subr.mxu0 0.0
  %2011 = vmatpush1.xpose.msra.mxu0 0.0
  %2012 = vmatprep.subr.mxu0 0.0
  %2013 = vmatpush1.xpose.msra.mxu0 0.0
  %2014 = vmatprep.subr.mxu0 0.0
  %2015 = vmatpush1.xpose.msra.mxu0 0.0
  %2016 = vmatprep.subr.mxu0 0.0
  %2017 = vmatpush1.xpose.msra.mxu0 0.0
  %2018 = vmatprep.subr.mxu0 0.0
  %2019 = vmatpush1.xpose.msra.mxu0 0.0
  %2020 = vmatprep.subr.mxu0 0.0
  %2021 = vmatpush1.xpose.msra.mxu0 0.0
  %2022 = vmatprep.subr.mxu0 0.0
  %2023 = vmatpush1.xpose.msra.mxu0 0.0
  %2024 = vmatprep.subr.mxu0 0.0
  %2025 = vmatpush1.xpose.msra.mxu0 0.0
  %2026 = vmatprep.subr.mxu0 0.0
  %2027 = vmatpush1.xpose.msra.mxu0 0.0
  %2028 = vmatprep.subr.mxu0 0.0
  %2029 = vmatpush1.xpose.msra.mxu0 0.0
  %2030 = vmatprep.subr.mxu0 0.0
  %2031 = vmatpush1.xpose.msra.mxu0 0.0
  %2032 = vmatprep.subr.mxu0 0.0
  %2033 = vmatpush1.xpose.msra.mxu0 0.0
  %2034 = vmatprep.subr.mxu0 0.0
  %2035 = vmatpush1.xpose.msra.mxu0 0.0
  %2036 = vmatprep.subr.mxu0 0.0
  %2037 = vmatpush1.xpose.msra.mxu0 0.0
  %2038 = vmatprep.subr.mxu0 0.0
  %2039 = vmatpush1.xpose.msra.mxu0 0.0
  %2040 = vmatprep.subr.mxu0 0.0
  %2041 = vmatpush1.xpose.msra.mxu0 0.0
  %2042 = vmatprep.subr.mxu0 0.0
  %2043 = vmatpush1.xpose.msra.mxu0 0.0
  %2044 = vmatprep.subr.mxu0 0.0
  %2045 = vmatpush1.xpose.msra.mxu0 0.0
  %2046 = vmatprep.subr.mxu0 0.0
  %2047 = vmatpush1.xpose.msra.mxu0 0.0
  %2048 = vmatprep.subr.mxu0 0.0
  %2049 = vmatpush1.xpose.msra.mxu0 0.0
  %2050 = vmatprep.subr.mxu0 0.0
  %2051 = vmatpush1.xpose.msra.mxu0 0.0
  %2052 = vmatprep.subr.mxu0 0.0
  %2053 = vmatpush1.xpose.msra.mxu0 0.0
  %2054 = vmatprep.mubr.f32.mxu0 0.0
  %v2055 = vand.u32 %v178, 4294901760
  %2056 = vmatmul.mubr.f32.gmra.mrb[0].mxu0 %v2055
  %v2057 = vpop.f32.mrb[0].mxu0
  %v2058 = vadd.f32 %v1938, %v2057
  %v2059 = vpop.f32.mrb[0].mxu0
  %2060 = vmatprep.mubr.f32.mxu0 0.0
  %v2061 = vand.u32 %v181, 4294901760
  %2062 = vmatmul.mubr.f32.gmra.mrb[0].mxu0 %v2061
  %v2063 = vpop.f32.mrb[0].mxu0
  %v2064 = vadd.f32 %v1944, %v2063
  %v2065 = vpop.f32.mrb[0].mxu0
  %2066 = vmatprep.mubr.f32.mxu0 0.0
  %v2067 = vand.u32 %v184, 4294901760
  %2068 = vmatmul.mubr.f32.gmra.mrb[0].mxu0 %v2067
  %v2069 = vpop.f32.mrb[0].mxu0
  %v2070 = vadd.f32 %v1950, %v2069
  %v2071 = vpop.f32.mrb[0].mxu0
  %2072 = vmatprep.mubr.f32.mxu0 0.0
  %v2073 = vand.u32 %v187, 4294901760
  %2074 = vmatmul.mubr.f32.gmra.mrb[0].mxu0 %v2073
  %v2075 = vpop.f32.mrb[0].mxu0
  %v2076 = vadd.f32 %v1956, %v2075
  %v2077 = vpop.f32.mrb[0].mxu0
  %2078 = vmatprep.mubr.f32.mxu0 0.0
  %v2079 = vand.u32 %v190, 4294901760
  %2080 = vmatmul.mubr.f32.gmra.mrb[0].mxu0 %v2079
  %v2081 = vpop.f32.mrb[0].mxu0
  %v2082 = vadd.f32 %v1962, %v2081
  %v2083 = vpop.f32.mrb[0].mxu0
  %2084 = vmatprep.mubr.f32.mxu0 0.0
  %v2085 = vand.u32 %v193, 4294901760
  %2086 = vmatmul.mubr.f32.gmra.mrb[0].mxu0 %v2085
  %v2087 = vpop.f32.mrb[0].mxu0
  %v2088 = vadd.f32 %v1968, %v2087
  %v2089 = vpop.f32.mrb[0].mxu0
  %2090 = vmatprep.mubr.f32.mxu0 0.0
  %v2091 = vand.u32 %v196, 4294901760
  %2092 = vmatmul.mubr.f32.gmra.mrb[0].mxu0 %v2091
  %v2093 = vpop.f32.mrb[0].mxu0
  %v2094 = vadd.f32 %v1974, %v2093
  %v2095 = vpop.f32.mrb[0].mxu0
  %2096 = vmatprep.mubr.f32.mxu0 0.0
  %v2097 = vand.u32 %v199, 4294901760
  %2098 = vmatmul.mubr.f32.gmra.mrb[0].mxu0 %v2097
  %v2099 = vpop.f32.mrb[0].mxu0
  %v2100 = vadd.f32 %v1980, %v2099
  %v2101 = vpop.f32.mrb[0].mxu0
  %2102 = vdwg.mxu0
  %2104 = vset.pattern.permute.xlu0 0
  %2105 = vperm.xlu0 %2104, %v2058
  %v2106 = vpop.permute.xlu0 %2105
  %2108 = vset.pattern.permute.xlu0 0
  %2109 = vperm.xlu0 %2108, %v2064
  %v2110 = vpop.permute.xlu0 %2109
  %2112 = vset.pattern.permute.xlu0 0
  %2113 = vperm.xlu0 %2112, %v2070
  %v2114 = vpop.permute.xlu0 %2113
  %2116 = vset.pattern.permute.xlu0 0
  %2117 = vperm.xlu0 %2116, %v2076
  %v2118 = vpop.permute.xlu0 %2117
  %2120 = vset.pattern.permute.xlu0 0
  %2121 = vperm.xlu0 %2120, %v2082
  %v2122 = vpop.permute.xlu0 %2121
  %2124 = vset.pattern.permute.xlu0 0
  %2125 = vperm.xlu0 %2124, %v2088
  %v2126 = vpop.permute.xlu0 %2125
  %2128 = vset.pattern.permute.xlu0 0
  %2129 = vperm.xlu0 %2128, %v2094
  %v2130 = vpop.permute.xlu0 %2129
  %2132 = vset.pattern.permute.xlu0 0
  %2133 = vperm.xlu0 %2132, %v2100
  %v2134 = vpop.permute.xlu0 %2133
  %2135 = vrot.lane.b32.xlu0 %v2058, 127
  %v2136 = vpop.permute.xlu0 %2135
  %2137 = vrot.lane.b32.xlu0 %v2064, 127
  %v2138 = vpop.permute.xlu0 %2137
  %2139 = vrot.lane.b32.xlu0 %v2070, 127
  %v2140 = vpop.permute.xlu0 %2139
  %2141 = vrot.lane.b32.xlu0 %v2076, 127
  %v2142 = vpop.permute.xlu0 %2141
  %2143 = vrot.lane.b32.xlu0 %v2082, 127
  %v2144 = vpop.permute.xlu0 %2143
  %2145 = vrot.lane.b32.xlu0 %v2088, 127
  %v2146 = vpop.permute.xlu0 %2145
  %2147 = vrot.lane.b32.xlu0 %v2094, 127
  %v2148 = vpop.permute.xlu0 %2147
  %2149 = vrot.lane.b32.xlu0 %v2100, 127
  %v2150 = vpop.permute.xlu0 %2149
  %2151 = vrot.lane.b32.xlu0 %v2106, 127
  %v2152 = vpop.permute.xlu0 %2151
  %2153 = vrot.lane.b32.xlu0 %v2110, 127
  %v2154 = vpop.permute.xlu0 %2153
  %2155 = vrot.lane.b32.xlu0 %v2114, 127
  %v2156 = vpop.permute.xlu0 %2155
  %2157 = vrot.lane.b32.xlu0 %v2118, 127
  %v2158 = vpop.permute.xlu0 %2157
  %2159 = vrot.lane.b32.xlu0 %v2122, 127
  %v2160 = vpop.permute.xlu0 %2159
  %2161 = vrot.lane.b32.xlu0 %v2126, 127
  %v2162 = vpop.permute.xlu0 %2161
  %2163 = vrot.lane.b32.xlu0 %v2130, 127
  %v2164 = vpop.permute.xlu0 %2163
  %2165 = vrot.lane.b32.xlu0 %v2134, 127
  %v2166 = vpop.permute.xlu0 %2165
  %s2183 = scalar_lea.vmem %s3, 128
  %2184 = vst.msk [vmem:[%s2183] sm:$0xff] %vm1127, %v2136
  %2185 = vst.msk [vmem:[%s2183 + $0x8] sm:$0xff] %vm1127, %v2138
  %2186 = vst.msk [vmem:[%s2183 + $0x10] sm:$0xff] %vm1127, %v2140
  %2187 = vst.msk [vmem:[%s2183 + $0x18] sm:$0xff] %vm1127, %v2142
  %2188 = vst.msk [vmem:[%s2183 + $0x20] sm:$0xff] %vm1127, %v2144
  %2189 = vst.msk [vmem:[%s2183 + $0x28] sm:$0xff] %vm1127, %v2146
  %2190 = vst.msk [vmem:[%s2183 + $0x30] sm:$0xff] %vm1127, %v2148
  %2191 = vst.msk [vmem:[%s2183 + $0x38] sm:$0xff] %vm1127, %v2150
  %2192 = vst.msk [vmem:[%s2183 + $0x40] sm:$0xff] %vm1127, %v2152
  %2193 = vst.msk [vmem:[%s2183 + $0x48] sm:$0xff] %vm1127, %v2154
  %2194 = vst.msk [vmem:[%s2183 + $0x50] sm:$0xff] %vm1127, %v2156
  %2195 = vst.msk [vmem:[%s2183 + $0x58] sm:$0xff] %vm1127, %v2158
  %2196 = vst.msk [vmem:[%s2183 + $0x60] sm:$0xff] %vm1127, %v2160
  %2197 = vst.msk [vmem:[%s2183 + $0x68] sm:$0xff] %vm1127, %v2162
  %2198 = vst.msk [vmem:[%s2183 + $0x70] sm:$0xff] %vm1127, %v2164
  %2199 = vst.msk [vmem:[%s2183 + $0x78] sm:$0xff] %vm1127, %v2166
  // Predicated region
  $region14: #{tpu_custom_call.1} parent=0 // pred_check
    _
  $region15: #{tpu_custom_call.1} parent=0 // pred_check_branch
    %2201 = sbr.rel (0) target = $region17
  $region16: #{tpu_custom_call.1} parent=0 // pred_region
    _
  $region17: #{tpu_custom_call.1} parent=0 // pred_fallthru
    _
  // Predicated region
  $region18: #{tpu_custom_call.1} parent=0 // pred_check
    _
  $region19: #{tpu_custom_call.1} parent=0 // pred_check_branch
    %2203 = sbr.rel (0) target = $region21
  $region20: #{tpu_custom_call.1} parent=0 // pred_region
    _
  $region21: #{tpu_custom_call.1} parent=0 // pred_fallthru
    _

</llo_original>
